<compile_context>
chip_gen: v6e
topology: v6e:2x2x1
jax: 0.10.0
libtpu: 0.0.40
codegen_flags: <defaults>
</compile_context>

<pallas_src>
import functools

import jax
import jax.numpy as jnp
from jax.experimental import pallas as pl
from jax.experimental.pallas import tpu as pltpu


def _mlp_kernel(xT_ref, w1T_ref, b1_ref, w2T_ref, b2_ref, w3_ref, b3_ref,
                oT_ref, *, in_is_scalar, out_is_scalar):
    # Transposed layout: batch on lanes, features on sublanes.
    xT = xT_ref[...]                                   # (in_dim, bt)
    b1 = b1_ref[...]                                   # (hid, 1)

    if in_is_scalar:
        # input_dim == 1: layer 1 is an outer product -> pure VPU broadcast
        # multiply; a K=1 MXU matmul would waste the systolic array.
        h1 = w1T_ref[...] * xT + b1                    # (hid,1)*(1,bt) -> (hid, bt)
    else:
        h1 = jnp.dot(w1T_ref[...], xT,
                     preferred_element_type=jnp.float32,
                     precision=jax.lax.Precision.HIGHEST) + b1
    h1 = jnp.maximum(h1, 0.0)

    # Middle layer: the only real matmul -> MXU.  (hid, hid) @ (hid, bt).
    h2 = jnp.dot(w2T_ref[...], h1,
                 preferred_element_type=jnp.float32,
                 precision=jax.lax.Precision.HIGHEST) + b2_ref[...]
    h2 = jnp.maximum(h2, 0.0)

    b3 = b3_ref[...]                                   # (out_dim, 1)
    if out_is_scalar:
        # output_dim == 1: layer 3 is a hid-wide reduction -> XLU sublane
        # reduce instead of an N=1 MXU matmul (MXU has slack anyway, but at
        # bt <= 512 nothing saturates; keep the cheap reduce).
        out = jnp.sum(h2 * w3_ref[...], axis=0, keepdims=True) + b3   # (1, bt)
    else:
        out = jnp.dot(w3_ref[...], h2,
                      preferred_element_type=jnp.float32,
                      precision=jax.lax.Precision.HIGHEST) + b3
    oT_ref[...] = out.astype(oT_ref.dtype)             # lane-dense store


@functools.partial(jax.jit, static_argnames=("max_batch_tile",))
def sinusoid_mlp_forward(x, params, *, max_batch_tile=512):
    """x: [B, input_dim] float32. params: dict of weights (in, out) / biases."""
    w1, b1 = params["w1"], params["b1"]
    w2, b2 = params["w2"], params["b2"]
    w3, b3 = params["w3"], params["b3"]

    B, in_dim = x.shape
    hid = w1.shape[1]
    out_dim = w3.shape[1]

    assert max_batch_tile % 128 == 0, "max_batch_tile must be a multiple of 128"

    # Lane-dense batch tile: multiple of 128, collapsed to a single grid step
    # whenever the (padded) batch fits in one tile.  Capping at 512 keeps the
    # f32 h1/h2 live ranges at <= ~32 vregs (no spills) while amortizing the
    # per-grid-step overhead.
    b128 = ((B + 127) // 128) * 128
    bt = min(b128, int(max_batch_tile))
    Bp = ((B + bt - 1) // bt) * bt
    if Bp != B:
        # Padded rows compute harmless garbage and are sliced off below.
        # (Do not add input_output_aliases / in-place writeback over them.)
        x = jnp.pad(x, ((0, Bp - B), (0, 0)))

    in_is_scalar = in_dim == 1
    out_is_scalar = out_dim == 1

    # Transposed layout plumbing.  For size-1 feature axes a reshape is a free
    # relabeling (no XLA transpose HLO, no extra HBM round trip).
    if in_is_scalar:
        xT = x.reshape(1, Bp)                  # (1, Bp)   batch on lanes
        w1T = w1.reshape(hid, 1)               # (hid, 1)
    else:
        # TODO(synk): absorb these into the kernel (in-kernel transpose) for
        # in_dim > 1 instead of emitting wrapper-side XLA transposes.
        xT = x.T
        w1T = w1.T
    w2T = w2.T                                 # tiny (hid, hid), once per call
    w3x = w3 if out_is_scalar else w3.T        # (hid, 1) | (out_dim, hid)
    b1c = b1.reshape(hid, 1)
    b2c = b2.reshape(hid, 1)
    b3c = b3.reshape(out_dim, 1)

    n_tiles = Bp // bt
    grid = (n_tiles,)
    # Only shard across v7x's two TensorCores when each core gets enough work
    # to hide its own prologue / weight DMAs (~batch >= 4K at hid ~ 32).
    dim_sem = ("parallel",) if Bp >= 4096 else ("arbitrary",)

    flops = 2 * Bp * (in_dim * hid + hid * hid + hid * out_dim)
    bytes_accessed = 4 * (Bp * in_dim + Bp * out_dim
                          + in_dim * hid + hid * hid + hid * out_dim
                          + 2 * hid + out_dim)

    kernel = functools.partial(_mlp_kernel,
                               in_is_scalar=in_is_scalar,
                               out_is_scalar=out_is_scalar)

    outT = pl.pallas_call(
        kernel,
        out_shape=jax.ShapeDtypeStruct((out_dim, Bp), x.dtype),
        grid_spec=pltpu.PrefetchScalarGridSpec(
            num_scalar_prefetch=0,
            grid=grid,
            in_specs=[
                pl.BlockSpec((in_dim, bt), lambda i: (0, i)),    # x^T tile
                pl.BlockSpec((hid, in_dim), lambda i: (0, 0)),   # w1^T
                pl.BlockSpec((hid, 1), lambda i: (0, 0)),        # b1
                pl.BlockSpec((hid, hid), lambda i: (0, 0)),      # w2^T
                pl.BlockSpec((hid, 1), lambda i: (0, 0)),        # b2
                pl.BlockSpec(w3x.shape, lambda i: (0, 0)),       # w3 / w3^T
                pl.BlockSpec((out_dim, 1), lambda i: (0, 0)),    # b3
            ],
            out_specs=pl.BlockSpec((out_dim, bt), lambda i: (0, i)),
        ),
        compiler_params=pltpu.CompilerParams(
            dimension_semantics=dim_sem,
        ),
        cost_estimate=pl.CostEstimate(
            flops=flops, transcendentals=0, bytes_accessed=bytes_accessed),
    )(xT, w1T, b1c, w2T, b2c, w3x, b3c)

    # Back to (B, out_dim).  out_dim == 1 -> free reshape, else transpose.
    if out_is_scalar:
        return outT.reshape(Bp, 1)[:B]
    return outT.T[:B]


def init_params(key, input_dim, hidden_dim, output_dim):
    """Deterministic init mirroring PyTorch nn.Linear default:
    U(-1/sqrt(fan_in), 1/sqrt(fan_in)) for both weight and bias."""
    ks = jax.random.split(key, 6)

    def lin(kw, kb, fan_in, fan_out):
        bound = 1.0 / jnp.sqrt(fan_in)
        w = jax.random.uniform(kw, (fan_in, fan_out), jnp.float32, -bound, bound)
        b = jax.random.uniform(kb, (fan_out,), jnp.float32, -bound, bound)
        return w, b

    w1, b1 = lin(ks[0], ks[1], input_dim, hidden_dim)
    w2, b2 = lin(ks[2], ks[3], hidden_dim, hidden_dim)
    w3, b3 = lin(ks[4], ks[5], hidden_dim, output_dim)
    return {"w1": w1, "b1": b1, "w2": w2, "b2": b2, "w3": w3, "b3": b3}


def reference_forward(x, p):
    hp = jax.lax.Precision.HIGHEST
    h1 = jnp.maximum(jnp.dot(x, p["w1"], precision=hp) + p["b1"], 0.0)
    h2 = jnp.maximum(jnp.dot(h1, p["w2"], precision=hp) + p["b2"], 0.0)
    return jnp.dot(h2, p["w3"], precision=hp) + p["b3"]


if __name__ == "__main__":
    # Sinusoid-regression shapes: scalar input, scalar output, small hidden MLP.
    input_dim, hidden_dim, output_dim = 1, 32, 1
    batch = 512        # bt auto-picks 512 -> grid = (1,), single TensorCore

    key = jax.random.PRNGKey(0)
    kx, kp = jax.random.split(key)
    x = jax.random.uniform(kx, (batch, input_dim), jnp.float32, -5.0, 5.0)
    params = init_params(kp, input_dim, hidden_dim, output_dim)

    out = sinusoid_mlp_forward(x, params)
    out = jax.block_until_ready(out)

    ref = reference_forward(x, params)
    assert out.shape == (batch, output_dim)
    assert jnp.allclose(out, ref, atol=1e-4, rtol=1e-4), "mismatch vs reference"

    print("KERNEL_OK")
</pallas_src>

<mosaic_0001>
module attributes {stable_mosaic.version = 11 : i64} {
  func.func @_mlp_kernel(%arg0: i32, %arg1: memref<1x512xf32, #tpu.memory_space<vmem>>, %arg2: memref<32x1xf32, #tpu.memory_space<vmem>>, %arg3: memref<32x1xf32, #tpu.memory_space<vmem>>, %arg4: memref<32x32xf32, #tpu.memory_space<vmem>>, %arg5: memref<32x1xf32, #tpu.memory_space<vmem>>, %arg6: memref<32x1xf32, #tpu.memory_space<vmem>>, %arg7: memref<1x1xf32, #tpu.memory_space<vmem>>, %arg8: memref<1x512xf32, #tpu.memory_space<vmem>>) attributes {dimension_semantics = [#tpu.dimension_semantics<arbitrary>], iteration_bounds = array<i64: 1>, scalar_prefetch = 0 : i64, scratch_operands = 0 : i64, tpu.core_type = #tpu.core_type<tc>, window_params = [{transform_indices = @transform_0, window_bounds = array<i64: 1, 512>}, {pipeline_mode = #tpu.pipeline_mode<synchronous>, transform_indices = @transform_1, window_bounds = array<i64: 32, 1>}, {pipeline_mode = #tpu.pipeline_mode<synchronous>, transform_indices = @transform_2, window_bounds = array<i64: 32, 1>}, {pipeline_mode = #tpu.pipeline_mode<synchronous>, transform_indices = @transform_3, window_bounds = array<i64: 32, 32>}, {pipeline_mode = #tpu.pipeline_mode<synchronous>, transform_indices = @transform_4, window_bounds = array<i64: 32, 1>}, {pipeline_mode = #tpu.pipeline_mode<synchronous>, transform_indices = @transform_5, window_bounds = array<i64: 32, 1>}, {pipeline_mode = #tpu.pipeline_mode<synchronous>, transform_indices = @transform_6, window_bounds = array<i64: 1, 1>}, {transform_indices = @transform_7, window_bounds = array<i64: 1, 512>}]} {
    %c0 = arith.constant 0 : index
    %c0_0 = arith.constant 0 : index
    %0 = vector.load %arg1[%c0, %c0_0] : memref<1x512xf32, #tpu.memory_space<vmem>>, vector<1x512xf32>
    %c0_1 = arith.constant 0 : index
    %c0_2 = arith.constant 0 : index
    %1 = vector.load %arg3[%c0_1, %c0_2] : memref<32x1xf32, #tpu.memory_space<vmem>>, vector<32x1xf32>
    %c0_3 = arith.constant 0 : index
    %c0_4 = arith.constant 0 : index
    %2 = vector.load %arg2[%c0_3, %c0_4] : memref<32x1xf32, #tpu.memory_space<vmem>>, vector<32x1xf32>
    %3 = vector.broadcast %2 : vector<32x1xf32> to vector<32x512xf32>
    %4 = vector.broadcast %0 : vector<1x512xf32> to vector<32x512xf32>
    %5 = arith.mulf %3, %4 : vector<32x512xf32>
    %6 = vector.broadcast %1 : vector<32x1xf32> to vector<32x512xf32>
    %7 = arith.addf %5, %6 : vector<32x512xf32>
    %cst = arith.constant 0.000000e+00 : f32
    %8 = vector.broadcast %cst : f32 to vector<32x512xf32>
    %9 = arith.maximumf %7, %8 : vector<32x512xf32>
    %c0_5 = arith.constant 0 : index
    %c0_6 = arith.constant 0 : index
    %10 = vector.load %arg4[%c0_5, %c0_6] : memref<32x32xf32, #tpu.memory_space<vmem>>, vector<32x32xf32>
    %cst_7 = arith.constant dense<0.000000e+00> : vector<32x512xf32>
    %11 = tpu.matmul %10, %9, %cst_7 {dimension_numbers = #tpu.dot_dimension_numbers<[1], [0], [0], [1], [0, 0, 1, 1], [], []>, precision = #tpu.contract_precision<fp32>} : vector<32x32xf32>, vector<32x512xf32>, vector<32x512xf32> -> vector<32x512xf32>
    %c0_8 = arith.constant 0 : index
    %c0_9 = arith.constant 0 : index
    %12 = vector.load %arg5[%c0_8, %c0_9] : memref<32x1xf32, #tpu.memory_space<vmem>>, vector<32x1xf32>
    %13 = vector.broadcast %12 : vector<32x1xf32> to vector<32x512xf32>
    %14 = arith.addf %11, %13 : vector<32x512xf32>
    %cst_10 = arith.constant 0.000000e+00 : f32
    %15 = vector.broadcast %cst_10 : f32 to vector<32x512xf32>
    %16 = arith.maximumf %14, %15 : vector<32x512xf32>
    %c0_11 = arith.constant 0 : index
    %c0_12 = arith.constant 0 : index
    %17 = vector.load %arg7[%c0_11, %c0_12] : memref<1x1xf32, #tpu.memory_space<vmem>>, vector<1x1xf32>
    %c0_13 = arith.constant 0 : index
    %c0_14 = arith.constant 0 : index
    %18 = vector.load %arg6[%c0_13, %c0_14] : memref<32x1xf32, #tpu.memory_space<vmem>>, vector<32x1xf32>
    %19 = vector.broadcast %18 : vector<32x1xf32> to vector<32x512xf32>
    %20 = arith.mulf %16, %19 : vector<32x512xf32>
    %cst_15 = arith.constant dense<0.000000e+00> : vector<512xf32>
    %21 = vector.multi_reduction <add>, %20, %cst_15 [0] : vector<32x512xf32> to vector<512xf32>
    %22 = vector.shape_cast %21 : vector<512xf32> to vector<1x512xf32>
    %23 = vector.broadcast %17 : vector<1x1xf32> to vector<1x512xf32>
    %24 = arith.addf %22, %23 : vector<1x512xf32>
    %c0_16 = arith.constant 0 : index
    %c0_17 = arith.constant 0 : index
    %25 = vector.load %arg8[%c0_16, %c0_17] : memref<1x512xf32, #tpu.memory_space<vmem>>, vector<1x512xf32>
    tpu.vector_store %arg8[%c0_16, %c0_17], %24 {strides = array<i32>} : memref<1x512xf32, #tpu.memory_space<vmem>>, vector<1x512xf32>,
    return
  }
  func.func @transform_0(%arg0: i32) -> (i32, i32) {
    %c0_i32 = arith.constant 0 : i32
    %c0_i32_0 = arith.constant 0 : i32
    return %c0_i32, %arg0 : i32, i32
  }
  func.func @transform_1(%arg0: i32) -> (i32, i32) {
    %c0_i32 = arith.constant 0 : i32
    %c0_i32_0 = arith.constant 0 : i32
    %c0_i32_1 = arith.constant 0 : i32
    return %c0_i32, %c0_i32_0 : i32, i32
  }
  func.func @transform_2(%arg0: i32) -> (i32, i32) {
    %c0_i32 = arith.constant 0 : i32
    %c0_i32_0 = arith.constant 0 : i32
    %c0_i32_1 = arith.constant 0 : i32
    return %c0_i32, %c0_i32_0 : i32, i32
  }
  func.func @transform_3(%arg0: i32) -> (i32, i32) {
    %c0_i32 = arith.constant 0 : i32
    %c0_i32_0 = arith.constant 0 : i32
    %c0_i32_1 = arith.constant 0 : i32
    return %c0_i32, %c0_i32_0 : i32, i32
  }
  func.func @transform_4(%arg0: i32) -> (i32, i32) {
    %c0_i32 = arith.constant 0 : i32
    %c0_i32_0 = arith.constant 0 : i32
    %c0_i32_1 = arith.constant 0 : i32
    return %c0_i32, %c0_i32_0 : i32, i32
  }
  func.func @transform_5(%arg0: i32) -> (i32, i32) {
    %c0_i32 = arith.constant 0 : i32
    %c0_i32_0 = arith.constant 0 : i32
    %c0_i32_1 = arith.constant 0 : i32
    return %c0_i32, %c0_i32_0 : i32, i32
  }
  func.func @transform_6(%arg0: i32) -> (i32, i32) {
    %c0_i32 = arith.constant 0 : i32
    %c0_i32_0 = arith.constant 0 : i32
    %c0_i32_1 = arith.constant 0 : i32
    return %c0_i32, %c0_i32_0 : i32, i32
  }
  func.func @transform_7(%arg0: i32) -> (i32, i32) {
    %c0_i32 = arith.constant 0 : i32
    %c0_i32_0 = arith.constant 0 : i32
    return %c0_i32, %arg0 : i32, i32
  }
}

</mosaic_0001>

<llo_original>
// kernel: sinusoid_mlp_forward.1
$region0: #{sinusoid_mlp_forward.1}
  #allocation0 [shape = 'u32[]', space=smem, size = 0x4, offset = 0x4, fixed_abs, tag = 'smem constant byte address 0x4 - core index']
  #allocation1 [shape = 'u32[144,128]{1,0:T(1,128)}', space=vmem, size = 0x12000, scoped, tag = 'internal scratch']
  #allocation2 [shape = 'f32[1,1]{1,0:T(1,128)S(1)}', space=vmem, size = 0x200, scoped, tag = 'scoped memory for sinusoid_mlp_forward.1']
  %s0 = inlined_call_operand.vmem [shape: f32[1,512], index: 0, kind: input, shape index: {}]
  %s1 = inlined_call_operand.vmem [shape: f32[32,1], index: 1, kind: input, shape index: {}]
  %s2 = inlined_call_operand.vmem [shape: f32[32,1], index: 2, kind: input, shape index: {}]
  %s3 = inlined_call_operand.vmem [shape: f32[32,32], index: 3, kind: input, shape index: {}]
  %s4 = inlined_call_operand.vmem [shape: f32[32,1], index: 4, kind: input, shape index: {}]
  %s5 = inlined_call_operand.vmem [shape: f32[32,1], index: 5, kind: input, shape index: {}]
  %s6 = inlined_call_operand.<no memory space> [shape: f32[1,1], index: 6, kind: input, shape index: {}]
  %s7 = inlined_call_operand.hbm [shape: f32[1,512], index: 7, kind: output, shape index: {}]
  %s8 = sld [smem:[#allocation0]]
  $region38: #{sinusoid_mlp_forward.1} parent=0
    _
  %s10 = ssub.s32 1, %s8
  %s11 = scalar_select 0, %s10, %s8
  %v12 = vstv %s6
  %13 = vst [vmem:[#allocation2] sm:$0x1] %v12
  $region1: #{sinusoid_mlp_forward.1} parent=0
    #allocation3 [shape = 'u8[2048]{0}', space=vmem, size = 0x800, scoped, tag = 'output window, operand 0, single buffered']
    #allocation4 [shape = 's32[1]{0}', space=sflag, size = 0x4, scoped, tag = 'scoped memory for sinusoid_mlp_forward.1']
    %14 = vsyncpa [#allocation4], 0
    // Predicated region
    $region2: #{sinusoid_mlp_forward.1} parent=1 // pred_check
      _
    $region3: #{sinusoid_mlp_forward.1} parent=1 // pred_check_branch
      %16 = sbr.rel (0) target = $region5
    $region4: #{sinusoid_mlp_forward.1} parent=1 // pred_region
      _
    $region5: #{sinusoid_mlp_forward.1} parent=1 // pred_fallthru
      _
    // Predicated region
    $region6: #{sinusoid_mlp_forward.1} parent=1 // pred_check
      _
    $region7: #{sinusoid_mlp_forward.1} parent=1 // pred_check_branch
      %18 = sbr.rel (0) target = $region9
    $region8: #{sinusoid_mlp_forward.1} parent=1 // pred_region
      _
    $region9: #{sinusoid_mlp_forward.1} parent=1 // pred_fallthru
      _
    // Predicated region
    $region10: #{sinusoid_mlp_forward.1} parent=1 // pred_check
      _
    $region11: #{sinusoid_mlp_forward.1} parent=1 // pred_check_branch
      %20 = sbr.rel (0) target = $region13
    $region12: #{sinusoid_mlp_forward.1} parent=1 // pred_region
      _
    $region13: #{sinusoid_mlp_forward.1} parent=1 // pred_fallthru
      _
    // Predicated region
    $region14: #{sinusoid_mlp_forward.1} parent=1 // pred_check
      _
    $region15: #{sinusoid_mlp_forward.1} parent=1 // pred_check_branch
      %22 = sbr.rel (0) target = $region17
    $region16: #{sinusoid_mlp_forward.1} parent=1 // pred_region
      _
    $region17: #{sinusoid_mlp_forward.1} parent=1 // pred_fallthru
      _
    // Predicated region
    $region18: #{sinusoid_mlp_forward.1} parent=1 // pred_check
      _
    $region19: #{sinusoid_mlp_forward.1} parent=1 // pred_check_branch
      %24 = sbr.rel (0) target = $region21
    $region20: #{sinusoid_mlp_forward.1} parent=1 // pred_region
      _
    $region21: #{sinusoid_mlp_forward.1} parent=1 // pred_fallthru
      _
    // Predicated region
    $region22: #{sinusoid_mlp_forward.1} parent=1 // pred_check
      _
    $region23: #{sinusoid_mlp_forward.1} parent=1 // pred_check_branch
      %26 = sbr.rel (0) target = $region25
    $region24: #{sinusoid_mlp_forward.1} parent=1 // pred_region
      _
    $region25: #{sinusoid_mlp_forward.1} parent=1 // pred_fallthru
      _
    // Predicated region
    $region26: #{sinusoid_mlp_forward.1} parent=1 // pred_check
      _
    $region27: #{sinusoid_mlp_forward.1} parent=1 // pred_check_branch
      %28 = sbr.rel (0) target = $region29
    $region28: #{sinusoid_mlp_forward.1} parent=1 // pred_region
      _
    $region29: #{sinusoid_mlp_forward.1} parent=1 // pred_fallthru
      _
    %v29 = vld [vmem:[%s0] sm:$0xf]
    %v30 = vld [vmem:[%s2] sm:$0xff]
    %v31 = vld [vmem:[%s2 + $0x8] sm:$0xff]
    %v32 = vld [vmem:[%s2 + $0x10] sm:$0xff]
    %v33 = vld [vmem:[%s2 + $0x18] sm:$0xff]
    %v34 = vld [vmem:[%s1] sm:$0xff]
    %v35 = vld [vmem:[%s1 + $0x8] sm:$0xff]
    %v36 = vld [vmem:[%s1 + $0x10] sm:$0xff]
    %v37 = vld [vmem:[%s1 + $0x18] sm:$0xff]
    %39 = vset.pattern.permute.xlu0 0
    %40 = vperm.xlu0 %39, %v34
    %v41 = vpop.permute.xlu0 %40
    %44 = vset.pattern.permute.xlu0 0
    %45 = vperm.xlu0 %44, %v35
    %v46 = vpop.permute.xlu0 %45
    %49 = vset.pattern.permute.xlu0 0
    %50 = vperm.xlu0 %49, %v36
    %v51 = vpop.permute.xlu0 %50
    %54 = vset.pattern.permute.xlu0 0
    %55 = vperm.xlu0 %54, %v37
    %v56 = vpop.permute.xlu0 %55
    %v59 = vlaneseq
    %v60 = vshrl.u32 %v59, 7
    %v61 = vsub.s32 0, %v60
    %v62 = vrot.slane %v29, %v61
    %v63 = vlaneseq
    %v64 = vshrl.u32 %v63, 7
    %v65 = vsub.s32 1, %v64
    %v66 = vrot.slane %v29, %v65
    %v67 = vlaneseq
    %v68 = vshrl.u32 %v67, 7
    %v69 = vsub.s32 2, %v68
    %v70 = vrot.slane %v29, %v69
    %v71 = vlaneseq
    %v72 = vshrl.u32 %v71, 7
    %v73 = vsub.s32 3, %v72
    %v74 = vrot.slane %v29, %v73
    %v79 = vmul.f32 %v41, %v62
    %v80 = vmul.f32 %v41, %v66
    %v81 = vmul.f32 %v41, %v70
    %v82 = vmul.f32 %v41, %v74
    %v83 = vmul.f32 %v46, %v62
    %v84 = vmul.f32 %v46, %v66
    %v85 = vmul.f32 %v46, %v70
    %v86 = vmul.f32 %v46, %v74
    %v87 = vmul.f32 %v51, %v62
    %v88 = vmul.f32 %v51, %v66
    %v89 = vmul.f32 %v51, %v70
    %v90 = vmul.f32 %v51, %v74
    %v91 = vmul.f32 %v56, %v62
    %v92 = vmul.f32 %v56, %v66
    %v93 = vmul.f32 %v56, %v70
    %v94 = vmul.f32 %v56, %v74
    %96 = vset.pattern.permute.xlu0 0
    %97 = vperm.xlu0 %96, %v30
    %v98 = vpop.permute.xlu0 %97
    %101 = vset.pattern.permute.xlu0 0
    %102 = vperm.xlu0 %101, %v31
    %v103 = vpop.permute.xlu0 %102
    %106 = vset.pattern.permute.xlu0 0
    %107 = vperm.xlu0 %106, %v32
    %v108 = vpop.permute.xlu0 %107
    %111 = vset.pattern.permute.xlu0 0
    %112 = vperm.xlu0 %111, %v33
    %v113 = vpop.permute.xlu0 %112
    %v115 = vadd.f32 %v79, %v98
    %v116 = vadd.f32 %v80, %v98
    %v117 = vadd.f32 %v81, %v98
    %v118 = vadd.f32 %v82, %v98
    %v119 = vadd.f32 %v83, %v103
    %v120 = vadd.f32 %v84, %v103
    %v121 = vadd.f32 %v85, %v103
    %v122 = vadd.f32 %v86, %v103
    %v123 = vadd.f32 %v87, %v108
    %v124 = vadd.f32 %v88, %v108
    %v125 = vadd.f32 %v89, %v108
    %v126 = vadd.f32 %v90, %v108
    %v127 = vadd.f32 %v91, %v113
    %v128 = vadd.f32 %v92, %v113
    %v129 = vadd.f32 %v93, %v113
    %v130 = vadd.f32 %v94, %v113
    %v131 = vmax.f32 %v115, 0.0
    %v132 = vmax.f32 %v116, 0.0
    %v133 = vmax.f32 %v117, 0.0
    %v134 = vmax.f32 %v118, 0.0
    %v135 = vmax.f32 %v119, 0.0
    %v136 = vmax.f32 %v120, 0.0
    %v137 = vmax.f32 %v121, 0.0
    %v138 = vmax.f32 %v122, 0.0
    %v139 = vmax.f32 %v123, 0.0
    %v140 = vmax.f32 %v124, 0.0
    %v141 = vmax.f32 %v125, 0.0
    %v142 = vmax.f32 %v126, 0.0
    %v143 = vmax.f32 %v127, 0.0
    %v144 = vmax.f32 %v128, 0.0
    %v145 = vmax.f32 %v129, 0.0
    %v146 = vmax.f32 %v130, 0.0
    %v147 = vld [vmem:[%s3] sm:$0xff]
    %v148 = vld [vmem:[%s3 + $0x8] sm:$0xff]
    %v149 = vld [vmem:[%s3 + $0x10] sm:$0xff]
    %v150 = vld [vmem:[%s3 + $0x18] sm:$0xff]
    %v151 = vld [vmem:[%s4] sm:$0xff]
    %v152 = vld [vmem:[%s4 + $0x8] sm:$0xff]
    %v153 = vld [vmem:[%s4 + $0x10] sm:$0xff]
    %v154 = vld [vmem:[%s4 + $0x18] sm:$0xff]
    %156 = vset.pattern.permute.xlu0 0
    %157 = vperm.xlu0 %156, %v151
    %v158 = vpop.permute.xlu0 %157
    %161 = vset.pattern.permute.xlu0 0
    %162 = vperm.xlu0 %161, %v152
    %v163 = vpop.permute.xlu0 %162
    %166 = vset.pattern.permute.xlu0 0
    %167 = vperm.xlu0 %166, %v153
    %v168 = vpop.permute.xlu0 %167
    %171 = vset.pattern.permute.xlu0 0
    %172 = vperm.xlu0 %171, %v154
    %v173 = vpop.permute.xlu0 %172
    %vm175 = vcmask 261120
    %v177 = vsel %vm175, %v147, 0
    %v180 = vsel %vm175, %v148, 0
    %v183 = vsel %vm175, %v149, 0
    %v186 = vsel %vm175, %v150, 0
    %188 = vmatprep.subr.mxu0 0.0
    %189 = vmatpush1.msra.mxu0 0.0
    %190 = vmatprep.subr.mxu0 0.0
    %191 = vmatpush1.msra.mxu0 0.0
    %192 = vmatprep.subr.mxu0 0.0
    %193 = vmatpush1.msra.mxu0 0.0
    %194 = vmatprep.subr.mxu0 0.0
    %195 = vmatpush1.msra.mxu0 0.0
    %196 = vmatprep.subr.mxu0 0.0
    %197 = vmatpush1.msra.mxu0 0.0
    %198 = vmatprep.subr.mxu0 0.0
    %199 = vmatpush1.msra.mxu0 0.0
    %200 = vmatprep.subr.mxu0 0.0
    %201 = vmatpush1.msra.mxu0 0.0
    %202 = vmatprep.subr.mxu0 0.0
    %203 = vmatpush1.msra.mxu0 0.0
    %204 = vmatprep.subr.mxu0 0.0
    %205 = vmatpush1.msra.mxu0 0.0
    %206 = vmatprep.subr.mxu0 0.0
    %207 = vmatpush1.msra.mxu0 0.0
    %208 = vmatprep.subr.mxu0 0.0
    %209 = vmatpush1.msra.mxu0 0.0
    %210 = vmatprep.subr.mxu0 0.0
    %211 = vmatpush1.msra.mxu0 0.0
    %v212 = vand.u32 %v144, 4294901760
    %213 = vmatprep.subr.mxu0 %v212
    %v214 = vand.u32 %v143, 4294901760
    %215 = vmatpush1.msra.mxu0 %v214
    %v216 = vand.u32 %v140, 4294901760
    %217 = vmatprep.subr.mxu0 %v216
    %v218 = vand.u32 %v139, 4294901760
    %219 = vmatpush1.msra.mxu0 %v218
    %v220 = vand.u32 %v136, 4294901760
    %221 = vmatprep.subr.mxu0 %v220
    %v222 = vand.u32 %v135, 4294901760
    %223 = vmatpush1.msra.mxu0 %v222
    %v224 = vand.u32 %v132, 4294901760
    %225 = vmatprep.subr.mxu0 %v224
    %v226 = vand.u32 %v131, 4294901760
    %227 = vmatpush1.msra.mxu0 %v226
    %228 = vmatprep.subr.mxu0 0.0
    %229 = vmatpush2.msra.mxu0 0.0
    %230 = vmatprep.subr.mxu0 0.0
    %231 = vmatpush2.msra.mxu0 0.0
    %232 = vmatprep.subr.mxu0 0.0
    %233 = vmatpush2.msra.mxu0 0.0
    %234 = vmatprep.subr.mxu0 0.0
    %235 = vmatpush2.msra.mxu0 0.0
    %236 = vmatprep.subr.mxu0 0.0
    %237 = vmatpush2.msra.mxu0 0.0
    %238 = vmatprep.subr.mxu0 0.0
    %239 = vmatpush2.msra.mxu0 0.0
    %240 = vmatprep.subr.mxu0 0.0
    %241 = vmatpush2.msra.mxu0 0.0
    %242 = vmatprep.subr.mxu0 0.0
    %243 = vmatpush2.msra.mxu0 0.0
    %244 = vmatprep.subr.mxu0 0.0
    %245 = vmatpush2.msra.mxu0 0.0
    %246 = vmatprep.subr.mxu0 0.0
    %247 = vmatpush2.msra.mxu0 0.0
    %248 = vmatprep.subr.mxu0 0.0
    %249 = vmatpush2.msra.mxu0 0.0
    %250 = vmatprep.subr.mxu0 0.0
    %251 = vmatpush2.msra.mxu0 0.0
    %252 = vmatprep.subr.mxu0 0.0
    %253 = vmatpush2.msra.mxu0 0.0
    %254 = vmatprep.subr.mxu0 0.0
    %255 = vmatpush2.msra.mxu0 0.0
    %256 = vmatprep.subr.mxu0 0.0
    %257 = vmatpush2.msra.mxu0 0.0
    %258 = vmatprep.subr.mxu0 0.0
    %259 = vmatpush2.msra.mxu0 0.0
    %260 = vmatprep.mubr.f32.mxu0 0.0
    %v261 = vand.u32 %v177, 4294901760
    %v262 = vsub.f32 %v177, %v261
    %v263 = vand.u32 %v262, 4294901760
    %v264 = vsub.f32 %v262, %v263
    %v265 = vand.u32 %v264, 4294901760
    %266 = vmatmul.mubr.f32.gmra.mxu0 %v265
    %v267 = vpop.f32.mrf.mxu0
    %v268 = vadd.f32 %v158, %v267
    %v269 = vpop.f32.mrf.mxu0
    %v270 = vadd.f32 %v158, %v269
    %271 = vmatprep.mubr.f32.mxu0 0.0
    %v272 = vand.u32 %v180, 4294901760
    %v273 = vsub.f32 %v180, %v272
    %v274 = vand.u32 %v273, 4294901760
    %v275 = vsub.f32 %v273, %v274
    %v276 = vand.u32 %v275, 4294901760
    %277 = vmatmul.mubr.f32.gmra.mxu0 %v276
    %v278 = vpop.f32.mrf.mxu0
    %v279 = vadd.f32 %v163, %v278
    %v280 = vpop.f32.mrf.mxu0
    %v281 = vadd.f32 %v163, %v280
    %282 = vmatprep.mubr.f32.mxu0 0.0
    %v283 = vand.u32 %v183, 4294901760
    %v284 = vsub.f32 %v183, %v283
    %v285 = vand.u32 %v284, 4294901760
    %v286 = vsub.f32 %v284, %v285
    %v287 = vand.u32 %v286, 4294901760
    %288 = vmatmul.mubr.f32.gmra.mxu0 %v287
    %v289 = vpop.f32.mrf.mxu0
    %v290 = vadd.f32 %v168, %v289
    %v291 = vpop.f32.mrf.mxu0
    %v292 = vadd.f32 %v168, %v291
    %293 = vmatprep.mubr.f32.mxu0 0.0
    %v294 = vand.u32 %v186, 4294901760
    %v295 = vsub.f32 %v186, %v294
    %v296 = vand.u32 %v295, 4294901760
    %v297 = vsub.f32 %v295, %v296
    %v298 = vand.u32 %v297, 4294901760
    %299 = vmatmul.mubr.f32.gmra.mxu0 %v298
    %v300 = vpop.f32.mrf.mxu0
    %v301 = vadd.f32 %v173, %v300
    %v302 = vpop.f32.mrf.mxu0
    %v303 = vadd.f32 %v173, %v302
    %304 = vdwg.mxu0
    %305 = vmatprep.subr.mxu0 0.0
    %306 = vmatpush1.msra.mxu0 0.0
    %307 = vmatprep.subr.mxu0 0.0
    %308 = vmatpush1.msra.mxu0 0.0
    %309 = vmatprep.subr.mxu0 0.0
    %310 = vmatpush1.msra.mxu0 0.0
    %311 = vmatprep.subr.mxu0 0.0
    %312 = vmatpush1.msra.mxu0 0.0
    %313 = vmatprep.subr.mxu0 0.0
    %314 = vmatpush1.msra.mxu0 0.0
    %315 = vmatprep.subr.mxu0 0.0
    %316 = vmatpush1.msra.mxu0 0.0
    %317 = vmatprep.subr.mxu0 0.0
    %318 = vmatpush1.msra.mxu0 0.0
    %319 = vmatprep.subr.mxu0 0.0
    %320 = vmatpush1.msra.mxu0 0.0
    %321 = vmatprep.subr.mxu0 0.0
    %322 = vmatpush1.msra.mxu0 0.0
    %323 = vmatprep.subr.mxu0 0.0
    %324 = vmatpush1.msra.mxu0 0.0
    %325 = vmatprep.subr.mxu0 0.0
    %326 = vmatpush1.msra.mxu0 0.0
    %327 = vmatprep.subr.mxu0 0.0
    %328 = vmatpush1.msra.mxu0 0.0
    %v329 = vand.u32 %v144, 4294901760
    %v330 = vsub.f32 %v144, %v329
    %v331 = vand.u32 %v330, 4294901760
    %v332 = vsub.f32 %v330, %v331
    %v333 = vand.u32 %v332, 4294901760
    %334 = vmatprep.subr.mxu0 %v333
    %v335 = vand.u32 %v143, 4294901760
    %v336 = vsub.f32 %v143, %v335
    %v337 = vand.u32 %v336, 4294901760
    %v338 = vsub.f32 %v336, %v337
    %v339 = vand.u32 %v338, 4294901760
    %340 = vmatpush1.msra.mxu0 %v339
    %v341 = vand.u32 %v140, 4294901760
    %v342 = vsub.f32 %v140, %v341
    %v343 = vand.u32 %v342, 4294901760
    %v344 = vsub.f32 %v342, %v343
    %v345 = vand.u32 %v344, 4294901760
    %346 = vmatprep.subr.mxu0 %v345
    %v347 = vand.u32 %v139, 4294901760
    %v348 = vsub.f32 %v139, %v347
    %v349 = vand.u32 %v348, 4294901760
    %v350 = vsub.f32 %v348, %v349
    %v351 = vand.u32 %v350, 4294901760
    %352 = vmatpush1.msra.mxu0 %v351
    %v353 = vand.u32 %v136, 4294901760
    %v354 = vsub.f32 %v136, %v353
    %v355 = vand.u32 %v354, 4294901760
    %v356 = vsub.f32 %v354, %v355
    %v357 = vand.u32 %v356, 4294901760
    %358 = vmatprep.subr.mxu0 %v357
    %v359 = vand.u32 %v135, 4294901760
    %v360 = vsub.f32 %v135, %v359
    %v361 = vand.u32 %v360, 4294901760
    %v362 = vsub.f32 %v360, %v361
    %v363 = vand.u32 %v362, 4294901760
    %364 = vmatpush1.msra.mxu0 %v363
    %v365 = vand.u32 %v132, 4294901760
    %v366 = vsub.f32 %v132, %v365
    %v367 = vand.u32 %v366, 4294901760
    %v368 = vsub.f32 %v366, %v367
    %v369 = vand.u32 %v368, 4294901760
    %370 = vmatprep.subr.mxu0 %v369
    %v371 = vand.u32 %v131, 4294901760
    %v372 = vsub.f32 %v131, %v371
    %v373 = vand.u32 %v372, 4294901760
    %v374 = vsub.f32 %v372, %v373
    %v375 = vand.u32 %v374, 4294901760
    %376 = vmatpush1.msra.mxu0 %v375
    %377 = vmatprep.subr.mxu0 0.0
    %378 = vmatpush2.msra.mxu0 0.0
    %379 = vmatprep.subr.mxu0 0.0
    %380 = vmatpush2.msra.mxu0 0.0
    %381 = vmatprep.subr.mxu0 0.0
    %382 = vmatpush2.msra.mxu0 0.0
    %383 = vmatprep.subr.mxu0 0.0
    %384 = vmatpush2.msra.mxu0 0.0
    %385 = vmatprep.subr.mxu0 0.0
    %386 = vmatpush2.msra.mxu0 0.0
    %387 = vmatprep.subr.mxu0 0.0
    %388 = vmatpush2.msra.mxu0 0.0
    %389 = vmatprep.subr.mxu0 0.0
    %390 = vmatpush2.msra.mxu0 0.0
    %391 = vmatprep.subr.mxu0 0.0
    %392 = vmatpush2.msra.mxu0 0.0
    %393 = vmatprep.subr.mxu0 0.0
    %394 = vmatpush2.msra.mxu0 0.0
    %395 = vmatprep.subr.mxu0 0.0
    %396 = vmatpush2.msra.mxu0 0.0
    %397 = vmatprep.subr.mxu0 0.0
    %398 = vmatpush2.msra.mxu0 0.0
    %399 = vmatprep.subr.mxu0 0.0
    %400 = vmatpush2.msra.mxu0 0.0
    %401 = vmatprep.subr.mxu0 0.0
    %402 = vmatpush2.msra.mxu0 0.0
    %403 = vmatprep.subr.mxu0 0.0
    %404 = vmatpush2.msra.mxu0 0.0
    %405 = vmatprep.subr.mxu0 0.0
    %406 = vmatpush2.msra.mxu0 0.0
    %407 = vmatprep.subr.mxu0 0.0
    %408 = vmatpush2.msra.mxu0 0.0
    %409 = vmatprep.mubr.f32.mxu0 0.0
    %v410 = vand.u32 %v177, 4294901760
    %411 = vmatmul.mubr.f32.gmra.mxu0 %v410
    %v412 = vpop.f32.mrf.mxu0
    %v413 = vadd.f32 %v268, %v412
    %v414 = vpop.f32.mrf.mxu0
    %v415 = vadd.f32 %v270, %v414
    %416 = vmatprep.mubr.f32.mxu0 0.0
    %v417 = vand.u32 %v180, 4294901760
    %418 = vmatmul.mubr.f32.gmra.mxu0 %v417
    %v419 = vpop.f32.mrf.mxu0
    %v420 = vadd.f32 %v279, %v419
    %v421 = vpop.f32.mrf.mxu0
    %v422 = vadd.f32 %v281, %v421
    %423 = vmatprep.mubr.f32.mxu0 0.0
    %v424 = vand.u32 %v183, 4294901760
    %425 = vmatmul.mubr.f32.gmra.mxu0 %v424
    %v426 = vpop.f32.mrf.mxu0
    %v427 = vadd.f32 %v290, %v426
    %v428 = vpop.f32.mrf.mxu0
    %v429 = vadd.f32 %v292, %v428
    %430 = vmatprep.mubr.f32.mxu0 0.0
    %v431 = vand.u32 %v186, 4294901760
    %432 = vmatmul.mubr.f32.gmra.mxu0 %v431
    %v433 = vpop.f32.mrf.mxu0
    %v434 = vadd.f32 %v301, %v433
    %v435 = vpop.f32.mrf.mxu0
    %v436 = vadd.f32 %v303, %v435
    %437 = vdwg.mxu0
    %438 = vmatprep.subr.mxu0 0.0
    %439 = vmatpush1.msra.mxu0 0.0
    %440 = vmatprep.subr.mxu0 0.0
    %441 = vmatpush1.msra.mxu0 0.0
    %442 = vmatprep.subr.mxu0 0.0
    %443 = vmatpush1.msra.mxu0 0.0
    %444 = vmatprep.subr.mxu0 0.0
    %445 = vmatpush1.msra.mxu0 0.0
    %446 = vmatprep.subr.mxu0 0.0
    %447 = vmatpush1.msra.mxu0 0.0
    %448 = vmatprep.subr.mxu0 0.0
    %449 = vmatpush1.msra.mxu0 0.0
    %450 = vmatprep.subr.mxu0 0.0
    %451 = vmatpush1.msra.mxu0 0.0
    %452 = vmatprep.subr.mxu0 0.0
    %453 = vmatpush1.msra.mxu0 0.0
    %454 = vmatprep.subr.mxu0 0.0
    %455 = vmatpush1.msra.mxu0 0.0
    %456 = vmatprep.subr.mxu0 0.0
    %457 = vmatpush1.msra.mxu0 0.0
    %458 = vmatprep.subr.mxu0 0.0
    %459 = vmatpush1.msra.mxu0 0.0
    %460 = vmatprep.subr.mxu0 0.0
    %461 = vmatpush1.msra.mxu0 0.0
    %v462 = vand.u32 %v144, 4294901760
    %v463 = vsub.f32 %v144, %v462
    %464 = vmatprep.subr.mxu0 %v463
    %v465 = vand.u32 %v143, 4294901760
    %v466 = vsub.f32 %v143, %v465
    %467 = vmatpush1.msra.mxu0 %v466
    %v468 = vand.u32 %v140, 4294901760
    %v469 = vsub.f32 %v140, %v468
    %470 = vmatprep.subr.mxu0 %v469
    %v471 = vand.u32 %v139, 4294901760
    %v472 = vsub.f32 %v139, %v471
    %473 = vmatpush1.msra.mxu0 %v472
    %v474 = vand.u32 %v136, 4294901760
    %v475 = vsub.f32 %v136, %v474
    %476 = vmatprep.subr.mxu0 %v475
    %v477 = vand.u32 %v135, 4294901760
    %v478 = vsub.f32 %v135, %v477
    %479 = vmatpush1.msra.mxu0 %v478
    %v480 = vand.u32 %v132, 4294901760
    %v481 = vsub.f32 %v132, %v480
    %482 = vmatprep.subr.mxu0 %v481
    %v483 = vand.u32 %v131, 4294901760
    %v484 = vsub.f32 %v131, %v483
    %485 = vmatpush1.msra.mxu0 %v484
    %486 = vmatprep.subr.mxu0 0.0
    %487 = vmatpush2.msra.mxu0 0.0
    %488 = vmatprep.subr.mxu0 0.0
    %489 = vmatpush2.msra.mxu0 0.0
    %490 = vmatprep.subr.mxu0 0.0
    %491 = vmatpush2.msra.mxu0 0.0
    %492 = vmatprep.subr.mxu0 0.0
    %493 = vmatpush2.msra.mxu0 0.0
    %494 = vmatprep.subr.mxu0 0.0
    %495 = vmatpush2.msra.mxu0 0.0
    %496 = vmatprep.subr.mxu0 0.0
    %497 = vmatpush2.msra.mxu0 0.0
    %498 = vmatprep.subr.mxu0 0.0
    %499 = vmatpush2.msra.mxu0 0.0
    %500 = vmatprep.subr.mxu0 0.0
    %501 = vmatpush2.msra.mxu0 0.0
    %502 = vmatprep.subr.mxu0 0.0
    %503 = vmatpush2.msra.mxu0 0.0
    %504 = vmatprep.subr.mxu0 0.0
    %505 = vmatpush2.msra.mxu0 0.0
    %506 = vmatprep.subr.mxu0 0.0
    %507 = vmatpush2.msra.mxu0 0.0
    %508 = vmatprep.subr.mxu0 0.0
    %509 = vmatpush2.msra.mxu0 0.0
    %510 = vmatprep.subr.mxu0 0.0
    %511 = vmatpush2.msra.mxu0 0.0
    %512 = vmatprep.subr.mxu0 0.0
    %513 = vmatpush2.msra.mxu0 0.0
    %514 = vmatprep.subr.mxu0 0.0
    %515 = vmatpush2.msra.mxu0 0.0
    %516 = vmatprep.subr.mxu0 0.0
    %517 = vmatpush2.msra.mxu0 0.0
    %518 = vmatprep.mubr.f32.mxu0 0.0
    %v519 = vand.u32 %v177, 4294901760
    %v520 = vsub.f32 %v177, %v519
    %521 = vmatmul.mubr.f32.gmra.mxu0 %v520
    %v522 = vpop.f32.mrf.mxu0
    %v523 = vadd.f32 %v413, %v522
    %v524 = vpop.f32.mrf.mxu0
    %v525 = vadd.f32 %v415, %v524
    %526 = vmatprep.mubr.f32.mxu0 0.0
    %v527 = vand.u32 %v180, 4294901760
    %v528 = vsub.f32 %v180, %v527
    %529 = vmatmul.mubr.f32.gmra.mxu0 %v528
    %v530 = vpop.f32.mrf.mxu0
    %v531 = vadd.f32 %v420, %v530
    %v532 = vpop.f32.mrf.mxu0
    %v533 = vadd.f32 %v422, %v532
    %534 = vmatprep.mubr.f32.mxu0 0.0
    %v535 = vand.u32 %v183, 4294901760
    %v536 = vsub.f32 %v183, %v535
    %537 = vmatmul.mubr.f32.gmra.mxu0 %v536
    %v538 = vpop.f32.mrf.mxu0
    %v539 = vadd.f32 %v427, %v538
    %v540 = vpop.f32.mrf.mxu0
    %v541 = vadd.f32 %v429, %v540
    %542 = vmatprep.mubr.f32.mxu0 0.0
    %v543 = vand.u32 %v186, 4294901760
    %v544 = vsub.f32 %v186, %v543
    %545 = vmatmul.mubr.f32.gmra.mxu0 %v544
    %v546 = vpop.f32.mrf.mxu0
    %v547 = vadd.f32 %v434, %v546
    %v548 = vpop.f32.mrf.mxu0
    %v549 = vadd.f32 %v436, %v548
    %550 = vdwg.mxu0
    %551 = vmatprep.subr.mxu0 0.0
    %552 = vmatpush1.msra.mxu0 0.0
    %553 = vmatprep.subr.mxu0 0.0
    %554 = vmatpush1.msra.mxu0 0.0
    %555 = vmatprep.subr.mxu0 0.0
    %556 = vmatpush1.msra.mxu0 0.0
    %557 = vmatprep.subr.mxu0 0.0
    %558 = vmatpush1.msra.mxu0 0.0
    %559 = vmatprep.subr.mxu0 0.0
    %560 = vmatpush1.msra.mxu0 0.0
    %561 = vmatprep.subr.mxu0 0.0
    %562 = vmatpush1.msra.mxu0 0.0
    %563 = vmatprep.subr.mxu0 0.0
    %564 = vmatpush1.msra.mxu0 0.0
    %565 = vmatprep.subr.mxu0 0.0
    %566 = vmatpush1.msra.mxu0 0.0
    %567 = vmatprep.subr.mxu0 0.0
    %568 = vmatpush1.msra.mxu0 0.0
    %569 = vmatprep.subr.mxu0 0.0
    %570 = vmatpush1.msra.mxu0 0.0
    %571 = vmatprep.subr.mxu0 0.0
    %572 = vmatpush1.msra.mxu0 0.0
    %573 = vmatprep.subr.mxu0 0.0
    %574 = vmatpush1.msra.mxu0 0.0
    %v575 = vand.u32 %v144, 4294901760
    %576 = vmatprep.subr.mxu0 %v575
    %v577 = vand.u32 %v143, 4294901760
    %578 = vmatpush1.msra.mxu0 %v577
    %v579 = vand.u32 %v140, 4294901760
    %580 = vmatprep.subr.mxu0 %v579
    %v581 = vand.u32 %v139, 4294901760
    %582 = vmatpush1.msra.mxu0 %v581
    %v583 = vand.u32 %v136, 4294901760
    %584 = vmatprep.subr.mxu0 %v583
    %v585 = vand.u32 %v135, 4294901760
    %586 = vmatpush1.msra.mxu0 %v585
    %v587 = vand.u32 %v132, 4294901760
    %588 = vmatprep.subr.mxu0 %v587
    %v589 = vand.u32 %v131, 4294901760
    %590 = vmatpush1.msra.mxu0 %v589
    %591 = vmatprep.subr.mxu0 0.0
    %592 = vmatpush2.msra.mxu0 0.0
    %593 = vmatprep.subr.mxu0 0.0
    %594 = vmatpush2.msra.mxu0 0.0
    %595 = vmatprep.subr.mxu0 0.0
    %596 = vmatpush2.msra.mxu0 0.0
    %597 = vmatprep.subr.mxu0 0.0
    %598 = vmatpush2.msra.mxu0 0.0
    %599 = vmatprep.subr.mxu0 0.0
    %600 = vmatpush2.msra.mxu0 0.0
    %601 = vmatprep.subr.mxu0 0.0
    %602 = vmatpush2.msra.mxu0 0.0
    %603 = vmatprep.subr.mxu0 0.0
    %604 = vmatpush2.msra.mxu0 0.0
    %605 = vmatprep.subr.mxu0 0.0
    %606 = vmatpush2.msra.mxu0 0.0
    %607 = vmatprep.subr.mxu0 0.0
    %608 = vmatpush2.msra.mxu0 0.0
    %609 = vmatprep.subr.mxu0 0.0
    %610 = vmatpush2.msra.mxu0 0.0
    %611 = vmatprep.subr.mxu0 0.0
    %612 = vmatpush2.msra.mxu0 0.0
    %613 = vmatprep.subr.mxu0 0.0
    %614 = vmatpush2.msra.mxu0 0.0
    %615 = vmatprep.subr.mxu0 0.0
    %616 = vmatpush2.msra.mxu0 0.0
    %617 = vmatprep.subr.mxu0 0.0
    %618 = vmatpush2.msra.mxu0 0.0
    %619 = vmatprep.subr.mxu0 0.0
    %620 = vmatpush2.msra.mxu0 0.0
    %621 = vmatprep.subr.mxu0 0.0
    %622 = vmatpush2.msra.mxu0 0.0
    %623 = vmatprep.mubr.f32.mxu0 0.0
    %v624 = vand.u32 %v177, 4294901760
    %v625 = vsub.f32 %v177, %v624
    %v626 = vand.u32 %v625, 4294901760
    %627 = vmatmul.mubr.f32.gmra.mxu0 %v626
    %v628 = vpop.f32.mrf.mxu0
    %v629 = vadd.f32 %v523, %v628
    %v630 = vpop.f32.mrf.mxu0
    %v631 = vadd.f32 %v525, %v630
    %632 = vmatprep.mubr.f32.mxu0 0.0
    %v633 = vand.u32 %v180, 4294901760
    %v634 = vsub.f32 %v180, %v633
    %v635 = vand.u32 %v634, 4294901760
    %636 = vmatmul.mubr.f32.gmra.mxu0 %v635
    %v637 = vpop.f32.mrf.mxu0
    %v638 = vadd.f32 %v531, %v637
    %v639 = vpop.f32.mrf.mxu0
    %v640 = vadd.f32 %v533, %v639
    %641 = vmatprep.mubr.f32.mxu0 0.0
    %v642 = vand.u32 %v183, 4294901760
    %v643 = vsub.f32 %v183, %v642
    %v644 = vand.u32 %v643, 4294901760
    %645 = vmatmul.mubr.f32.gmra.mxu0 %v644
    %v646 = vpop.f32.mrf.mxu0
    %v647 = vadd.f32 %v539, %v646
    %v648 = vpop.f32.mrf.mxu0
    %v649 = vadd.f32 %v541, %v648
    %650 = vmatprep.mubr.f32.mxu0 0.0
    %v651 = vand.u32 %v186, 4294901760
    %v652 = vsub.f32 %v186, %v651
    %v653 = vand.u32 %v652, 4294901760
    %654 = vmatmul.mubr.f32.gmra.mxu0 %v653
    %v655 = vpop.f32.mrf.mxu0
    %v656 = vadd.f32 %v547, %v655
    %v657 = vpop.f32.mrf.mxu0
    %v658 = vadd.f32 %v549, %v657
    %659 = vdwg.mxu0
    %660 = vmatprep.subr.mxu0 0.0
    %661 = vmatpush1.msra.mxu0 0.0
    %662 = vmatprep.subr.mxu0 0.0
    %663 = vmatpush1.msra.mxu0 0.0
    %664 = vmatprep.subr.mxu0 0.0
    %665 = vmatpush1.msra.mxu0 0.0
    %666 = vmatprep.subr.mxu0 0.0
    %667 = vmatpush1.msra.mxu0 0.0
    %668 = vmatprep.subr.mxu0 0.0
    %669 = vmatpush1.msra.mxu0 0.0
    %670 = vmatprep.subr.mxu0 0.0
    %671 = vmatpush1.msra.mxu0 0.0
    %672 = vmatprep.subr.mxu0 0.0
    %673 = vmatpush1.msra.mxu0 0.0
    %674 = vmatprep.subr.mxu0 0.0
    %675 = vmatpush1.msra.mxu0 0.0
    %676 = vmatprep.subr.mxu0 0.0
    %677 = vmatpush1.msra.mxu0 0.0
    %678 = vmatprep.subr.mxu0 0.0
    %679 = vmatpush1.msra.mxu0 0.0
    %680 = vmatprep.subr.mxu0 0.0
    %681 = vmatpush1.msra.mxu0 0.0
    %682 = vmatprep.subr.mxu0 0.0
    %683 = vmatpush1.msra.mxu0 0.0
    %v684 = vand.u32 %v144, 4294901760
    %v685 = vsub.f32 %v144, %v684
    %v686 = vand.u32 %v685, 4294901760
    %687 = vmatprep.subr.mxu0 %v686
    %v688 = vand.u32 %v143, 4294901760
    %v689 = vsub.f32 %v143, %v688
    %v690 = vand.u32 %v689, 4294901760
    %691 = vmatpush1.msra.mxu0 %v690
    %v692 = vand.u32 %v140, 4294901760
    %v693 = vsub.f32 %v140, %v692
    %v694 = vand.u32 %v693, 4294901760
    %695 = vmatprep.subr.mxu0 %v694
    %v696 = vand.u32 %v139, 4294901760
    %v697 = vsub.f32 %v139, %v696
    %v698 = vand.u32 %v697, 4294901760
    %699 = vmatpush1.msra.mxu0 %v698
    %v700 = vand.u32 %v136, 4294901760
    %v701 = vsub.f32 %v136, %v700
    %v702 = vand.u32 %v701, 4294901760
    %703 = vmatprep.subr.mxu0 %v702
    %v704 = vand.u32 %v135, 4294901760
    %v705 = vsub.f32 %v135, %v704
    %v706 = vand.u32 %v705, 4294901760
    %707 = vmatpush1.msra.mxu0 %v706
    %v708 = vand.u32 %v132, 4294901760
    %v709 = vsub.f32 %v132, %v708
    %v710 = vand.u32 %v709, 4294901760
    %711 = vmatprep.subr.mxu0 %v710
    %v712 = vand.u32 %v131, 4294901760
    %v713 = vsub.f32 %v131, %v712
    %v714 = vand.u32 %v713, 4294901760
    %715 = vmatpush1.msra.mxu0 %v714
    %716 = vmatprep.subr.mxu0 0.0
    %717 = vmatpush2.msra.mxu0 0.0
    %718 = vmatprep.subr.mxu0 0.0
    %719 = vmatpush2.msra.mxu0 0.0
    %720 = vmatprep.subr.mxu0 0.0
    %721 = vmatpush2.msra.mxu0 0.0
    %722 = vmatprep.subr.mxu0 0.0
    %723 = vmatpush2.msra.mxu0 0.0
    %724 = vmatprep.subr.mxu0 0.0
    %725 = vmatpush2.msra.mxu0 0.0
    %726 = vmatprep.subr.mxu0 0.0
    %727 = vmatpush2.msra.mxu0 0.0
    %728 = vmatprep.subr.mxu0 0.0
    %729 = vmatpush2.msra.mxu0 0.0
    %730 = vmatprep.subr.mxu0 0.0
    %731 = vmatpush2.msra.mxu0 0.0
    %732 = vmatprep.subr.mxu0 0.0
    %733 = vmatpush2.msra.mxu0 0.0
    %734 = vmatprep.subr.mxu0 0.0
    %735 = vmatpush2.msra.mxu0 0.0
    %736 = vmatprep.subr.mxu0 0.0
    %737 = vmatpush2.msra.mxu0 0.0
    %738 = vmatprep.subr.mxu0 0.0
    %739 = vmatpush2.msra.mxu0 0.0
    %740 = vmatprep.subr.mxu0 0.0
    %741 = vmatpush2.msra.mxu0 0.0
    %742 = vmatprep.subr.mxu0 0.0
    %743 = vmatpush2.msra.mxu0 0.0
    %744 = vmatprep.subr.mxu0 0.0
    %745 = vmatpush2.msra.mxu0 0.0
    %746 = vmatprep.subr.mxu0 0.0
    %747 = vmatpush2.msra.mxu0 0.0
    %748 = vmatprep.mubr.f32.mxu0 0.0
    %v749 = vand.u32 %v177, 4294901760
    %750 = vmatmul.mubr.f32.gmra.mxu0 %v749
    %v751 = vpop.f32.mrf.mxu0
    %v752 = vadd.f32 %v629, %v751
    %v753 = vpop.f32.mrf.mxu0
    %v754 = vadd.f32 %v631, %v753
    %755 = vmatprep.mubr.f32.mxu0 0.0
    %v756 = vand.u32 %v180, 4294901760
    %757 = vmatmul.mubr.f32.gmra.mxu0 %v756
    %v758 = vpop.f32.mrf.mxu0
    %v759 = vadd.f32 %v638, %v758
    %v760 = vpop.f32.mrf.mxu0
    %v761 = vadd.f32 %v640, %v760
    %762 = vmatprep.mubr.f32.mxu0 0.0
    %v763 = vand.u32 %v183, 4294901760
    %764 = vmatmul.mubr.f32.gmra.mxu0 %v763
    %v765 = vpop.f32.mrf.mxu0
    %v766 = vadd.f32 %v647, %v765
    %v767 = vpop.f32.mrf.mxu0
    %v768 = vadd.f32 %v649, %v767
    %769 = vmatprep.mubr.f32.mxu0 0.0
    %v770 = vand.u32 %v186, 4294901760
    %771 = vmatmul.mubr.f32.gmra.mxu0 %v770
    %v772 = vpop.f32.mrf.mxu0
    %v773 = vadd.f32 %v656, %v772
    %v774 = vpop.f32.mrf.mxu0
    %v775 = vadd.f32 %v658, %v774
    %776 = vdwg.mxu0
    %777 = vmatprep.subr.mxu0 0.0
    %778 = vmatpush1.msra.mxu0 0.0
    %779 = vmatprep.subr.mxu0 0.0
    %780 = vmatpush1.msra.mxu0 0.0
    %781 = vmatprep.subr.mxu0 0.0
    %782 = vmatpush1.msra.mxu0 0.0
    %783 = vmatprep.subr.mxu0 0.0
    %784 = vmatpush1.msra.mxu0 0.0
    %785 = vmatprep.subr.mxu0 0.0
    %786 = vmatpush1.msra.mxu0 0.0
    %787 = vmatprep.subr.mxu0 0.0
    %788 = vmatpush1.msra.mxu0 0.0
    %789 = vmatprep.subr.mxu0 0.0
    %790 = vmatpush1.msra.mxu0 0.0
    %791 = vmatprep.subr.mxu0 0.0
    %792 = vmatpush1.msra.mxu0 0.0
    %793 = vmatprep.subr.mxu0 0.0
    %794 = vmatpush1.msra.mxu0 0.0
    %795 = vmatprep.subr.mxu0 0.0
    %796 = vmatpush1.msra.mxu0 0.0
    %797 = vmatprep.subr.mxu0 0.0
    %798 = vmatpush1.msra.mxu0 0.0
    %799 = vmatprep.subr.mxu0 0.0
    %800 = vmatpush1.msra.mxu0 0.0
    %v801 = vand.u32 %v144, 4294901760
    %802 = vmatprep.subr.mxu0 %v801
    %v803 = vand.u32 %v143, 4294901760
    %804 = vmatpush1.msra.mxu0 %v803
    %v805 = vand.u32 %v140, 4294901760
    %806 = vmatprep.subr.mxu0 %v805
    %v807 = vand.u32 %v139, 4294901760
    %808 = vmatpush1.msra.mxu0 %v807
    %v809 = vand.u32 %v136, 4294901760
    %810 = vmatprep.subr.mxu0 %v809
    %v811 = vand.u32 %v135, 4294901760
    %812 = vmatpush1.msra.mxu0 %v811
    %v813 = vand.u32 %v132, 4294901760
    %814 = vmatprep.subr.mxu0 %v813
    %v815 = vand.u32 %v131, 4294901760
    %816 = vmatpush1.msra.mxu0 %v815
    %817 = vmatprep.subr.mxu0 0.0
    %818 = vmatpush2.msra.mxu0 0.0
    %819 = vmatprep.subr.mxu0 0.0
    %820 = vmatpush2.msra.mxu0 0.0
    %821 = vmatprep.subr.mxu0 0.0
    %822 = vmatpush2.msra.mxu0 0.0
    %823 = vmatprep.subr.mxu0 0.0
    %824 = vmatpush2.msra.mxu0 0.0
    %825 = vmatprep.subr.mxu0 0.0
    %826 = vmatpush2.msra.mxu0 0.0
    %827 = vmatprep.subr.mxu0 0.0
    %828 = vmatpush2.msra.mxu0 0.0
    %829 = vmatprep.subr.mxu0 0.0
    %830 = vmatpush2.msra.mxu0 0.0
    %831 = vmatprep.subr.mxu0 0.0
    %832 = vmatpush2.msra.mxu0 0.0
    %833 = vmatprep.subr.mxu0 0.0
    %834 = vmatpush2.msra.mxu0 0.0
    %835 = vmatprep.subr.mxu0 0.0
    %836 = vmatpush2.msra.mxu0 0.0
    %837 = vmatprep.subr.mxu0 0.0
    %838 = vmatpush2.msra.mxu0 0.0
    %839 = vmatprep.subr.mxu0 0.0
    %840 = vmatpush2.msra.mxu0 0.0
    %841 = vmatprep.subr.mxu0 0.0
    %842 = vmatpush2.msra.mxu0 0.0
    %843 = vmatprep.subr.mxu0 0.0
    %844 = vmatpush2.msra.mxu0 0.0
    %845 = vmatprep.subr.mxu0 0.0
    %846 = vmatpush2.msra.mxu0 0.0
    %847 = vmatprep.subr.mxu0 0.0
    %848 = vmatpush2.msra.mxu0 0.0
    %849 = vmatprep.mubr.f32.mxu0 0.0
    %v850 = vand.u32 %v177, 4294901760
    %851 = vmatmul.mubr.f32.gmra.mxu0 %v850
    %v852 = vpop.f32.mrf.mxu0
    %v853 = vadd.f32 %v752, %v852
    %v854 = vpop.f32.mrf.mxu0
    %v855 = vadd.f32 %v754, %v854
    %856 = vmatprep.mubr.f32.mxu0 0.0
    %v857 = vand.u32 %v180, 4294901760
    %858 = vmatmul.mubr.f32.gmra.mxu0 %v857
    %v859 = vpop.f32.mrf.mxu0
    %v860 = vadd.f32 %v759, %v859
    %v861 = vpop.f32.mrf.mxu0
    %v862 = vadd.f32 %v761, %v861
    %863 = vmatprep.mubr.f32.mxu0 0.0
    %v864 = vand.u32 %v183, 4294901760
    %865 = vmatmul.mubr.f32.gmra.mxu0 %v864
    %v866 = vpop.f32.mrf.mxu0
    %v867 = vadd.f32 %v766, %v866
    %v868 = vpop.f32.mrf.mxu0
    %v869 = vadd.f32 %v768, %v868
    %870 = vmatprep.mubr.f32.mxu0 0.0
    %v871 = vand.u32 %v186, 4294901760
    %872 = vmatmul.mubr.f32.gmra.mxu0 %v871
    %v873 = vpop.f32.mrf.mxu0
    %v874 = vadd.f32 %v773, %v873
    %v875 = vpop.f32.mrf.mxu0
    %v876 = vadd.f32 %v775, %v875
    %877 = vdwg.mxu0
    %878 = vmatprep.subr.mxu0 0.0
    %879 = vmatpush1.msra.mxu0 0.0
    %880 = vmatprep.subr.mxu0 0.0
    %881 = vmatpush1.msra.mxu0 0.0
    %882 = vmatprep.subr.mxu0 0.0
    %883 = vmatpush1.msra.mxu0 0.0
    %884 = vmatprep.subr.mxu0 0.0
    %885 = vmatpush1.msra.mxu0 0.0
    %886 = vmatprep.subr.mxu0 0.0
    %887 = vmatpush1.msra.mxu0 0.0
    %888 = vmatprep.subr.mxu0 0.0
    %889 = vmatpush1.msra.mxu0 0.0
    %890 = vmatprep.subr.mxu0 0.0
    %891 = vmatpush1.msra.mxu0 0.0
    %892 = vmatprep.subr.mxu0 0.0
    %893 = vmatpush1.msra.mxu0 0.0
    %894 = vmatprep.subr.mxu0 0.0
    %895 = vmatpush1.msra.mxu0 0.0
    %896 = vmatprep.subr.mxu0 0.0
    %897 = vmatpush1.msra.mxu0 0.0
    %898 = vmatprep.subr.mxu0 0.0
    %899 = vmatpush1.msra.mxu0 0.0
    %900 = vmatprep.subr.mxu0 0.0
    %901 = vmatpush1.msra.mxu0 0.0
    %v902 = vand.u32 %v146, 4294901760
    %903 = vmatprep.subr.mxu0 %v902
    %v904 = vand.u32 %v145, 4294901760
    %905 = vmatpush1.msra.mxu0 %v904
    %v906 = vand.u32 %v142, 4294901760
    %907 = vmatprep.subr.mxu0 %v906
    %v908 = vand.u32 %v141, 4294901760
    %909 = vmatpush1.msra.mxu0 %v908
    %v910 = vand.u32 %v138, 4294901760
    %911 = vmatprep.subr.mxu0 %v910
    %v912 = vand.u32 %v137, 4294901760
    %913 = vmatpush1.msra.mxu0 %v912
    %v914 = vand.u32 %v134, 4294901760
    %915 = vmatprep.subr.mxu0 %v914
    %v916 = vand.u32 %v133, 4294901760
    %917 = vmatpush1.msra.mxu0 %v916
    %918 = vmatprep.subr.mxu0 0.0
    %919 = vmatpush2.msra.mxu0 0.0
    %920 = vmatprep.subr.mxu0 0.0
    %921 = vmatpush2.msra.mxu0 0.0
    %922 = vmatprep.subr.mxu0 0.0
    %923 = vmatpush2.msra.mxu0 0.0
    %924 = vmatprep.subr.mxu0 0.0
    %925 = vmatpush2.msra.mxu0 0.0
    %926 = vmatprep.subr.mxu0 0.0
    %927 = vmatpush2.msra.mxu0 0.0
    %928 = vmatprep.subr.mxu0 0.0
    %929 = vmatpush2.msra.mxu0 0.0
    %930 = vmatprep.subr.mxu0 0.0
    %931 = vmatpush2.msra.mxu0 0.0
    %932 = vmatprep.subr.mxu0 0.0
    %933 = vmatpush2.msra.mxu0 0.0
    %934 = vmatprep.subr.mxu0 0.0
    %935 = vmatpush2.msra.mxu0 0.0
    %936 = vmatprep.subr.mxu0 0.0
    %937 = vmatpush2.msra.mxu0 0.0
    %938 = vmatprep.subr.mxu0 0.0
    %939 = vmatpush2.msra.mxu0 0.0
    %940 = vmatprep.subr.mxu0 0.0
    %941 = vmatpush2.msra.mxu0 0.0
    %942 = vmatprep.subr.mxu0 0.0
    %943 = vmatpush2.msra.mxu0 0.0
    %944 = vmatprep.subr.mxu0 0.0
    %945 = vmatpush2.msra.mxu0 0.0
    %946 = vmatprep.subr.mxu0 0.0
    %947 = vmatpush2.msra.mxu0 0.0
    %948 = vmatprep.subr.mxu0 0.0
    %949 = vmatpush2.msra.mxu0 0.0
    %950 = vmatprep.mubr.f32.mxu0 0.0
    %v951 = vand.u32 %v177, 4294901760
    %v952 = vsub.f32 %v177, %v951
    %v953 = vand.u32 %v952, 4294901760
    %v954 = vsub.f32 %v952, %v953
    %v955 = vand.u32 %v954, 4294901760
    %956 = vmatmul.mubr.f32.gmra.mxu0 %v955
    %v957 = vpop.f32.mrf.mxu0
    %v958 = vadd.f32 %v158, %v957
    %v959 = vpop.f32.mrf.mxu0
    %v960 = vadd.f32 %v158, %v959
    %961 = vmatprep.mubr.f32.mxu0 0.0
    %v962 = vand.u32 %v180, 4294901760
    %v963 = vsub.f32 %v180, %v962
    %v964 = vand.u32 %v963, 4294901760
    %v965 = vsub.f32 %v963, %v964
    %v966 = vand.u32 %v965, 4294901760
    %967 = vmatmul.mubr.f32.gmra.mxu0 %v966
    %v968 = vpop.f32.mrf.mxu0
    %v969 = vadd.f32 %v163, %v968
    %v970 = vpop.f32.mrf.mxu0
    %v971 = vadd.f32 %v163, %v970
    %972 = vmatprep.mubr.f32.mxu0 0.0
    %v973 = vand.u32 %v183, 4294901760
    %v974 = vsub.f32 %v183, %v973
    %v975 = vand.u32 %v974, 4294901760
    %v976 = vsub.f32 %v974, %v975
    %v977 = vand.u32 %v976, 4294901760
    %978 = vmatmul.mubr.f32.gmra.mxu0 %v977
    %v979 = vpop.f32.mrf.mxu0
    %v980 = vadd.f32 %v168, %v979
    %v981 = vpop.f32.mrf.mxu0
    %v982 = vadd.f32 %v168, %v981
    %983 = vmatprep.mubr.f32.mxu0 0.0
    %v984 = vand.u32 %v186, 4294901760
    %v985 = vsub.f32 %v186, %v984
    %v986 = vand.u32 %v985, 4294901760
    %v987 = vsub.f32 %v985, %v986
    %v988 = vand.u32 %v987, 4294901760
    %989 = vmatmul.mubr.f32.gmra.mxu0 %v988
    %v990 = vpop.f32.mrf.mxu0
    %v991 = vadd.f32 %v173, %v990
    %v992 = vpop.f32.mrf.mxu0
    %v993 = vadd.f32 %v173, %v992
    %994 = vdwg.mxu0
    %995 = vmatprep.subr.mxu0 0.0
    %996 = vmatpush1.msra.mxu0 0.0
    %997 = vmatprep.subr.mxu0 0.0
    %998 = vmatpush1.msra.mxu0 0.0
    %999 = vmatprep.subr.mxu0 0.0
    %1000 = vmatpush1.msra.mxu0 0.0
    %1001 = vmatprep.subr.mxu0 0.0
    %1002 = vmatpush1.msra.mxu0 0.0
    %1003 = vmatprep.subr.mxu0 0.0
    %1004 = vmatpush1.msra.mxu0 0.0
    %1005 = vmatprep.subr.mxu0 0.0
    %1006 = vmatpush1.msra.mxu0 0.0
    %1007 = vmatprep.subr.mxu0 0.0
    %1008 = vmatpush1.msra.mxu0 0.0
    %1009 = vmatprep.subr.mxu0 0.0
    %1010 = vmatpush1.msra.mxu0 0.0
    %1011 = vmatprep.subr.mxu0 0.0
    %1012 = vmatpush1.msra.mxu0 0.0
    %1013 = vmatprep.subr.mxu0 0.0
    %1014 = vmatpush1.msra.mxu0 0.0
    %1015 = vmatprep.subr.mxu0 0.0
    %1016 = vmatpush1.msra.mxu0 0.0
    %1017 = vmatprep.subr.mxu0 0.0
    %1018 = vmatpush1.msra.mxu0 0.0
    %v1019 = vand.u32 %v146, 4294901760
    %v1020 = vsub.f32 %v146, %v1019
    %v1021 = vand.u32 %v1020, 4294901760
    %v1022 = vsub.f32 %v1020, %v1021
    %v1023 = vand.u32 %v1022, 4294901760
    %1024 = vmatprep.subr.mxu0 %v1023
    %v1025 = vand.u32 %v145, 4294901760
    %v1026 = vsub.f32 %v145, %v1025
    %v1027 = vand.u32 %v1026, 4294901760
    %v1028 = vsub.f32 %v1026, %v1027
    %v1029 = vand.u32 %v1028, 4294901760
    %1030 = vmatpush1.msra.mxu0 %v1029
    %v1031 = vand.u32 %v142, 4294901760
    %v1032 = vsub.f32 %v142, %v1031
    %v1033 = vand.u32 %v1032, 4294901760
    %v1034 = vsub.f32 %v1032, %v1033
    %v1035 = vand.u32 %v1034, 4294901760
    %1036 = vmatprep.subr.mxu0 %v1035
    %v1037 = vand.u32 %v141, 4294901760
    %v1038 = vsub.f32 %v141, %v1037
    %v1039 = vand.u32 %v1038, 4294901760
    %v1040 = vsub.f32 %v1038, %v1039
    %v1041 = vand.u32 %v1040, 4294901760
    %1042 = vmatpush1.msra.mxu0 %v1041
    %v1043 = vand.u32 %v138, 4294901760
    %v1044 = vsub.f32 %v138, %v1043
    %v1045 = vand.u32 %v1044, 4294901760
    %v1046 = vsub.f32 %v1044, %v1045
    %v1047 = vand.u32 %v1046, 4294901760
    %1048 = vmatprep.subr.mxu0 %v1047
    %v1049 = vand.u32 %v137, 4294901760
    %v1050 = vsub.f32 %v137, %v1049
    %v1051 = vand.u32 %v1050, 4294901760
    %v1052 = vsub.f32 %v1050, %v1051
    %v1053 = vand.u32 %v1052, 4294901760
    %1054 = vmatpush1.msra.mxu0 %v1053
    %v1055 = vand.u32 %v134, 4294901760
    %v1056 = vsub.f32 %v134, %v1055
    %v1057 = vand.u32 %v1056, 4294901760
    %v1058 = vsub.f32 %v1056, %v1057
    %v1059 = vand.u32 %v1058, 4294901760
    %1060 = vmatprep.subr.mxu0 %v1059
    %v1061 = vand.u32 %v133, 4294901760
    %v1062 = vsub.f32 %v133, %v1061
    %v1063 = vand.u32 %v1062, 4294901760
    %v1064 = vsub.f32 %v1062, %v1063
    %v1065 = vand.u32 %v1064, 4294901760
    %1066 = vmatpush1.msra.mxu0 %v1065
    %1067 = vmatprep.subr.mxu0 0.0
    %1068 = vmatpush2.msra.mxu0 0.0
    %1069 = vmatprep.subr.mxu0 0.0
    %1070 = vmatpush2.msra.mxu0 0.0
    %1071 = vmatprep.subr.mxu0 0.0
    %1072 = vmatpush2.msra.mxu0 0.0
    %1073 = vmatprep.subr.mxu0 0.0
    %1074 = vmatpush2.msra.mxu0 0.0
    %1075 = vmatprep.subr.mxu0 0.0
    %1076 = vmatpush2.msra.mxu0 0.0
    %1077 = vmatprep.subr.mxu0 0.0
    %1078 = vmatpush2.msra.mxu0 0.0
    %1079 = vmatprep.subr.mxu0 0.0
    %1080 = vmatpush2.msra.mxu0 0.0
    %1081 = vmatprep.subr.mxu0 0.0
    %1082 = vmatpush2.msra.mxu0 0.0
    %1083 = vmatprep.subr.mxu0 0.0
    %1084 = vmatpush2.msra.mxu0 0.0
    %1085 = vmatprep.subr.mxu0 0.0
    %1086 = vmatpush2.msra.mxu0 0.0
    %1087 = vmatprep.subr.mxu0 0.0
    %1088 = vmatpush2.msra.mxu0 0.0
    %1089 = vmatprep.subr.mxu0 0.0
    %1090 = vmatpush2.msra.mxu0 0.0
    %1091 = vmatprep.subr.mxu0 0.0
    %1092 = vmatpush2.msra.mxu0 0.0
    %1093 = vmatprep.subr.mxu0 0.0
    %1094 = vmatpush2.msra.mxu0 0.0
    %1095 = vmatprep.subr.mxu0 0.0
    %1096 = vmatpush2.msra.mxu0 0.0
    %1097 = vmatprep.subr.mxu0 0.0
    %1098 = vmatpush2.msra.mxu0 0.0
    %1099 = vmatprep.mubr.f32.mxu0 0.0
    %v1100 = vand.u32 %v177, 4294901760
    %1101 = vmatmul.mubr.f32.gmra.mxu0 %v1100
    %v1102 = vpop.f32.mrf.mxu0
    %v1103 = vadd.f32 %v958, %v1102
    %v1104 = vpop.f32.mrf.mxu0
    %v1105 = vadd.f32 %v960, %v1104
    %1106 = vmatprep.mubr.f32.mxu0 0.0
    %v1107 = vand.u32 %v180, 4294901760
    %1108 = vmatmul.mubr.f32.gmra.mxu0 %v1107
    %v1109 = vpop.f32.mrf.mxu0
    %v1110 = vadd.f32 %v969, %v1109
    %v1111 = vpop.f32.mrf.mxu0
    %v1112 = vadd.f32 %v971, %v1111
    %1113 = vmatprep.mubr.f32.mxu0 0.0
    %v1114 = vand.u32 %v183, 4294901760
    %1115 = vmatmul.mubr.f32.gmra.mxu0 %v1114
    %v1116 = vpop.f32.mrf.mxu0
    %v1117 = vadd.f32 %v980, %v1116
    %v1118 = vpop.f32.mrf.mxu0
    %v1119 = vadd.f32 %v982, %v1118
    %1120 = vmatprep.mubr.f32.mxu0 0.0
    %v1121 = vand.u32 %v186, 4294901760
    %1122 = vmatmul.mubr.f32.gmra.mxu0 %v1121
    %v1123 = vpop.f32.mrf.mxu0
    %v1124 = vadd.f32 %v991, %v1123
    %v1125 = vpop.f32.mrf.mxu0
    %v1126 = vadd.f32 %v993, %v1125
    %1127 = vdwg.mxu0
    %1128 = vmatprep.subr.mxu0 0.0
    %1129 = vmatpush1.msra.mxu0 0.0
    %1130 = vmatprep.subr.mxu0 0.0
    %1131 = vmatpush1.msra.mxu0 0.0
    %1132 = vmatprep.subr.mxu0 0.0
    %1133 = vmatpush1.msra.mxu0 0.0
    %1134 = vmatprep.subr.mxu0 0.0
    %1135 = vmatpush1.msra.mxu0 0.0
    %1136 = vmatprep.subr.mxu0 0.0
    %1137 = vmatpush1.msra.mxu0 0.0
    %1138 = vmatprep.subr.mxu0 0.0
    %1139 = vmatpush1.msra.mxu0 0.0
    %1140 = vmatprep.subr.mxu0 0.0
    %1141 = vmatpush1.msra.mxu0 0.0
    %1142 = vmatprep.subr.mxu0 0.0
    %1143 = vmatpush1.msra.mxu0 0.0
    %1144 = vmatprep.subr.mxu0 0.0
    %1145 = vmatpush1.msra.mxu0 0.0
    %1146 = vmatprep.subr.mxu0 0.0
    %1147 = vmatpush1.msra.mxu0 0.0
    %1148 = vmatprep.subr.mxu0 0.0
    %1149 = vmatpush1.msra.mxu0 0.0
    %1150 = vmatprep.subr.mxu0 0.0
    %1151 = vmatpush1.msra.mxu0 0.0
    %v1152 = vand.u32 %v146, 4294901760
    %v1153 = vsub.f32 %v146, %v1152
    %1154 = vmatprep.subr.mxu0 %v1153
    %v1155 = vand.u32 %v145, 4294901760
    %v1156 = vsub.f32 %v145, %v1155
    %1157 = vmatpush1.msra.mxu0 %v1156
    %v1158 = vand.u32 %v142, 4294901760
    %v1159 = vsub.f32 %v142, %v1158
    %1160 = vmatprep.subr.mxu0 %v1159
    %v1161 = vand.u32 %v141, 4294901760
    %v1162 = vsub.f32 %v141, %v1161
    %1163 = vmatpush1.msra.mxu0 %v1162
    %v1164 = vand.u32 %v138, 4294901760
    %v1165 = vsub.f32 %v138, %v1164
    %1166 = vmatprep.subr.mxu0 %v1165
    %v1167 = vand.u32 %v137, 4294901760
    %v1168 = vsub.f32 %v137, %v1167
    %1169 = vmatpush1.msra.mxu0 %v1168
    %v1170 = vand.u32 %v134, 4294901760
    %v1171 = vsub.f32 %v134, %v1170
    %1172 = vmatprep.subr.mxu0 %v1171
    %v1173 = vand.u32 %v133, 4294901760
    %v1174 = vsub.f32 %v133, %v1173
    %1175 = vmatpush1.msra.mxu0 %v1174
    %1176 = vmatprep.subr.mxu0 0.0
    %1177 = vmatpush2.msra.mxu0 0.0
    %1178 = vmatprep.subr.mxu0 0.0
    %1179 = vmatpush2.msra.mxu0 0.0
    %1180 = vmatprep.subr.mxu0 0.0
    %1181 = vmatpush2.msra.mxu0 0.0
    %1182 = vmatprep.subr.mxu0 0.0
    %1183 = vmatpush2.msra.mxu0 0.0
    %1184 = vmatprep.subr.mxu0 0.0
    %1185 = vmatpush2.msra.mxu0 0.0
    %1186 = vmatprep.subr.mxu0 0.0
    %1187 = vmatpush2.msra.mxu0 0.0
    %1188 = vmatprep.subr.mxu0 0.0
    %1189 = vmatpush2.msra.mxu0 0.0
    %1190 = vmatprep.subr.mxu0 0.0
    %1191 = vmatpush2.msra.mxu0 0.0
    %1192 = vmatprep.subr.mxu0 0.0
    %1193 = vmatpush2.msra.mxu0 0.0
    %1194 = vmatprep.subr.mxu0 0.0
    %1195 = vmatpush2.msra.mxu0 0.0
    %1196 = vmatprep.subr.mxu0 0.0
    %1197 = vmatpush2.msra.mxu0 0.0
    %1198 = vmatprep.subr.mxu0 0.0
    %1199 = vmatpush2.msra.mxu0 0.0
    %1200 = vmatprep.subr.mxu0 0.0
    %1201 = vmatpush2.msra.mxu0 0.0
    %1202 = vmatprep.subr.mxu0 0.0
    %1203 = vmatpush2.msra.mxu0 0.0
    %1204 = vmatprep.subr.mxu0 0.0
    %1205 = vmatpush2.msra.mxu0 0.0
    %1206 = vmatprep.subr.mxu0 0.0
    %1207 = vmatpush2.msra.mxu0 0.0
    %1208 = vmatprep.mubr.f32.mxu0 0.0
    %v1209 = vand.u32 %v177, 4294901760
    %v1210 = vsub.f32 %v177, %v1209
    %1211 = vmatmul.mubr.f32.gmra.mxu0 %v1210
    %v1212 = vpop.f32.mrf.mxu0
    %v1213 = vadd.f32 %v1103, %v1212
    %v1214 = vpop.f32.mrf.mxu0
    %v1215 = vadd.f32 %v1105, %v1214
    %1216 = vmatprep.mubr.f32.mxu0 0.0
    %v1217 = vand.u32 %v180, 4294901760
    %v1218 = vsub.f32 %v180, %v1217
    %1219 = vmatmul.mubr.f32.gmra.mxu0 %v1218
    %v1220 = vpop.f32.mrf.mxu0
    %v1221 = vadd.f32 %v1110, %v1220
    %v1222 = vpop.f32.mrf.mxu0
    %v1223 = vadd.f32 %v1112, %v1222
    %1224 = vmatprep.mubr.f32.mxu0 0.0
    %v1225 = vand.u32 %v183, 4294901760
    %v1226 = vsub.f32 %v183, %v1225
    %1227 = vmatmul.mubr.f32.gmra.mxu0 %v1226
    %v1228 = vpop.f32.mrf.mxu0
    %v1229 = vadd.f32 %v1117, %v1228
    %v1230 = vpop.f32.mrf.mxu0
    %v1231 = vadd.f32 %v1119, %v1230
    %1232 = vmatprep.mubr.f32.mxu0 0.0
    %v1233 = vand.u32 %v186, 4294901760
    %v1234 = vsub.f32 %v186, %v1233
    %1235 = vmatmul.mubr.f32.gmra.mxu0 %v1234
    %v1236 = vpop.f32.mrf.mxu0
    %v1237 = vadd.f32 %v1124, %v1236
    %v1238 = vpop.f32.mrf.mxu0
    %v1239 = vadd.f32 %v1126, %v1238
    %1240 = vdwg.mxu0
    %1241 = vmatprep.subr.mxu0 0.0
    %1242 = vmatpush1.msra.mxu0 0.0
    %1243 = vmatprep.subr.mxu0 0.0
    %1244 = vmatpush1.msra.mxu0 0.0
    %1245 = vmatprep.subr.mxu0 0.0
    %1246 = vmatpush1.msra.mxu0 0.0
    %1247 = vmatprep.subr.mxu0 0.0
    %1248 = vmatpush1.msra.mxu0 0.0
    %1249 = vmatprep.subr.mxu0 0.0
    %1250 = vmatpush1.msra.mxu0 0.0
    %1251 = vmatprep.subr.mxu0 0.0
    %1252 = vmatpush1.msra.mxu0 0.0
    %1253 = vmatprep.subr.mxu0 0.0
    %1254 = vmatpush1.msra.mxu0 0.0
    %1255 = vmatprep.subr.mxu0 0.0
    %1256 = vmatpush1.msra.mxu0 0.0
    %1257 = vmatprep.subr.mxu0 0.0
    %1258 = vmatpush1.msra.mxu0 0.0
    %1259 = vmatprep.subr.mxu0 0.0
    %1260 = vmatpush1.msra.mxu0 0.0
    %1261 = vmatprep.subr.mxu0 0.0
    %1262 = vmatpush1.msra.mxu0 0.0
    %1263 = vmatprep.subr.mxu0 0.0
    %1264 = vmatpush1.msra.mxu0 0.0
    %v1265 = vand.u32 %v146, 4294901760
    %1266 = vmatprep.subr.mxu0 %v1265
    %v1267 = vand.u32 %v145, 4294901760
    %1268 = vmatpush1.msra.mxu0 %v1267
    %v1269 = vand.u32 %v142, 4294901760
    %1270 = vmatprep.subr.mxu0 %v1269
    %v1271 = vand.u32 %v141, 4294901760
    %1272 = vmatpush1.msra.mxu0 %v1271
    %v1273 = vand.u32 %v138, 4294901760
    %1274 = vmatprep.subr.mxu0 %v1273
    %v1275 = vand.u32 %v137, 4294901760
    %1276 = vmatpush1.msra.mxu0 %v1275
    %v1277 = vand.u32 %v134, 4294901760
    %1278 = vmatprep.subr.mxu0 %v1277
    %v1279 = vand.u32 %v133, 4294901760
    %1280 = vmatpush1.msra.mxu0 %v1279
    %1281 = vmatprep.subr.mxu0 0.0
    %1282 = vmatpush2.msra.mxu0 0.0
    %1283 = vmatprep.subr.mxu0 0.0
    %1284 = vmatpush2.msra.mxu0 0.0
    %1285 = vmatprep.subr.mxu0 0.0
    %1286 = vmatpush2.msra.mxu0 0.0
    %1287 = vmatprep.subr.mxu0 0.0
    %1288 = vmatpush2.msra.mxu0 0.0
    %1289 = vmatprep.subr.mxu0 0.0
    %1290 = vmatpush2.msra.mxu0 0.0
    %1291 = vmatprep.subr.mxu0 0.0
    %1292 = vmatpush2.msra.mxu0 0.0
    %1293 = vmatprep.subr.mxu0 0.0
    %1294 = vmatpush2.msra.mxu0 0.0
    %1295 = vmatprep.subr.mxu0 0.0
    %1296 = vmatpush2.msra.mxu0 0.0
    %1297 = vmatprep.subr.mxu0 0.0
    %1298 = vmatpush2.msra.mxu0 0.0
    %1299 = vmatprep.subr.mxu0 0.0
    %1300 = vmatpush2.msra.mxu0 0.0
    %1301 = vmatprep.subr.mxu0 0.0
    %1302 = vmatpush2.msra.mxu0 0.0
    %1303 = vmatprep.subr.mxu0 0.0
    %1304 = vmatpush2.msra.mxu0 0.0
    %1305 = vmatprep.subr.mxu0 0.0
    %1306 = vmatpush2.msra.mxu0 0.0
    %1307 = vmatprep.subr.mxu0 0.0
    %1308 = vmatpush2.msra.mxu0 0.0
    %1309 = vmatprep.subr.mxu0 0.0
    %1310 = vmatpush2.msra.mxu0 0.0
    %1311 = vmatprep.subr.mxu0 0.0
    %1312 = vmatpush2.msra.mxu0 0.0
    %1313 = vmatprep.mubr.f32.mxu0 0.0
    %v1314 = vand.u32 %v177, 4294901760
    %v1315 = vsub.f32 %v177, %v1314
    %v1316 = vand.u32 %v1315, 4294901760
    %1317 = vmatmul.mubr.f32.gmra.mxu0 %v1316
    %v1318 = vpop.f32.mrf.mxu0
    %v1319 = vadd.f32 %v1213, %v1318
    %v1320 = vpop.f32.mrf.mxu0
    %v1321 = vadd.f32 %v1215, %v1320
    %1322 = vmatprep.mubr.f32.mxu0 0.0
    %v1323 = vand.u32 %v180, 4294901760
    %v1324 = vsub.f32 %v180, %v1323
    %v1325 = vand.u32 %v1324, 4294901760
    %1326 = vmatmul.mubr.f32.gmra.mxu0 %v1325
    %v1327 = vpop.f32.mrf.mxu0
    %v1328 = vadd.f32 %v1221, %v1327
    %v1329 = vpop.f32.mrf.mxu0
    %v1330 = vadd.f32 %v1223, %v1329
    %1331 = vmatprep.mubr.f32.mxu0 0.0
    %v1332 = vand.u32 %v183, 4294901760
    %v1333 = vsub.f32 %v183, %v1332
    %v1334 = vand.u32 %v1333, 4294901760
    %1335 = vmatmul.mubr.f32.gmra.mxu0 %v1334
    %v1336 = vpop.f32.mrf.mxu0
    %v1337 = vadd.f32 %v1229, %v1336
    %v1338 = vpop.f32.mrf.mxu0
    %v1339 = vadd.f32 %v1231, %v1338
    %1340 = vmatprep.mubr.f32.mxu0 0.0
    %v1341 = vand.u32 %v186, 4294901760
    %v1342 = vsub.f32 %v186, %v1341
    %v1343 = vand.u32 %v1342, 4294901760
    %1344 = vmatmul.mubr.f32.gmra.mxu0 %v1343
    %v1345 = vpop.f32.mrf.mxu0
    %v1346 = vadd.f32 %v1237, %v1345
    %v1347 = vpop.f32.mrf.mxu0
    %v1348 = vadd.f32 %v1239, %v1347
    %1349 = vdwg.mxu0
    %1350 = vmatprep.subr.mxu0 0.0
    %1351 = vmatpush1.msra.mxu0 0.0
    %1352 = vmatprep.subr.mxu0 0.0
    %1353 = vmatpush1.msra.mxu0 0.0
    %1354 = vmatprep.subr.mxu0 0.0
    %1355 = vmatpush1.msra.mxu0 0.0
    %1356 = vmatprep.subr.mxu0 0.0
    %1357 = vmatpush1.msra.mxu0 0.0
    %1358 = vmatprep.subr.mxu0 0.0
    %1359 = vmatpush1.msra.mxu0 0.0
    %1360 = vmatprep.subr.mxu0 0.0
    %1361 = vmatpush1.msra.mxu0 0.0
    %1362 = vmatprep.subr.mxu0 0.0
    %1363 = vmatpush1.msra.mxu0 0.0
    %1364 = vmatprep.subr.mxu0 0.0
    %1365 = vmatpush1.msra.mxu0 0.0
    %1366 = vmatprep.subr.mxu0 0.0
    %1367 = vmatpush1.msra.mxu0 0.0
    %1368 = vmatprep.subr.mxu0 0.0
    %1369 = vmatpush1.msra.mxu0 0.0
    %1370 = vmatprep.subr.mxu0 0.0
    %1371 = vmatpush1.msra.mxu0 0.0
    %1372 = vmatprep.subr.mxu0 0.0
    %1373 = vmatpush1.msra.mxu0 0.0
    %v1374 = vand.u32 %v146, 4294901760
    %v1375 = vsub.f32 %v146, %v1374
    %v1376 = vand.u32 %v1375, 4294901760
    %1377 = vmatprep.subr.mxu0 %v1376
    %v1378 = vand.u32 %v145, 4294901760
    %v1379 = vsub.f32 %v145, %v1378
    %v1380 = vand.u32 %v1379, 4294901760
    %1381 = vmatpush1.msra.mxu0 %v1380
    %v1382 = vand.u32 %v142, 4294901760
    %v1383 = vsub.f32 %v142, %v1382
    %v1384 = vand.u32 %v1383, 4294901760
    %1385 = vmatprep.subr.mxu0 %v1384
    %v1386 = vand.u32 %v141, 4294901760
    %v1387 = vsub.f32 %v141, %v1386
    %v1388 = vand.u32 %v1387, 4294901760
    %1389 = vmatpush1.msra.mxu0 %v1388
    %v1390 = vand.u32 %v138, 4294901760
    %v1391 = vsub.f32 %v138, %v1390
    %v1392 = vand.u32 %v1391, 4294901760
    %1393 = vmatprep.subr.mxu0 %v1392
    %v1394 = vand.u32 %v137, 4294901760
    %v1395 = vsub.f32 %v137, %v1394
    %v1396 = vand.u32 %v1395, 4294901760
    %1397 = vmatpush1.msra.mxu0 %v1396
    %v1398 = vand.u32 %v134, 4294901760
    %v1399 = vsub.f32 %v134, %v1398
    %v1400 = vand.u32 %v1399, 4294901760
    %1401 = vmatprep.subr.mxu0 %v1400
    %v1402 = vand.u32 %v133, 4294901760
    %v1403 = vsub.f32 %v133, %v1402
    %v1404 = vand.u32 %v1403, 4294901760
    %1405 = vmatpush1.msra.mxu0 %v1404
    %1406 = vmatprep.subr.mxu0 0.0
    %1407 = vmatpush2.msra.mxu0 0.0
    %1408 = vmatprep.subr.mxu0 0.0
    %1409 = vmatpush2.msra.mxu0 0.0
    %1410 = vmatprep.subr.mxu0 0.0
    %1411 = vmatpush2.msra.mxu0 0.0
    %1412 = vmatprep.subr.mxu0 0.0
    %1413 = vmatpush2.msra.mxu0 0.0
    %1414 = vmatprep.subr.mxu0 0.0
    %1415 = vmatpush2.msra.mxu0 0.0
    %1416 = vmatprep.subr.mxu0 0.0
    %1417 = vmatpush2.msra.mxu0 0.0
    %1418 = vmatprep.subr.mxu0 0.0
    %1419 = vmatpush2.msra.mxu0 0.0
    %1420 = vmatprep.subr.mxu0 0.0
    %1421 = vmatpush2.msra.mxu0 0.0
    %1422 = vmatprep.subr.mxu0 0.0
    %1423 = vmatpush2.msra.mxu0 0.0
    %1424 = vmatprep.subr.mxu0 0.0
    %1425 = vmatpush2.msra.mxu0 0.0
    %1426 = vmatprep.subr.mxu0 0.0
    %1427 = vmatpush2.msra.mxu0 0.0
    %1428 = vmatprep.subr.mxu0 0.0
    %1429 = vmatpush2.msra.mxu0 0.0
    %1430 = vmatprep.subr.mxu0 0.0
    %1431 = vmatpush2.msra.mxu0 0.0
    %1432 = vmatprep.subr.mxu0 0.0
    %1433 = vmatpush2.msra.mxu0 0.0
    %1434 = vmatprep.subr.mxu0 0.0
    %1435 = vmatpush2.msra.mxu0 0.0
    %1436 = vmatprep.subr.mxu0 0.0
    %1437 = vmatpush2.msra.mxu0 0.0
    %1438 = vmatprep.mubr.f32.mxu0 0.0
    %v1439 = vand.u32 %v177, 4294901760
    %1440 = vmatmul.mubr.f32.gmra.mxu0 %v1439
    %v1441 = vpop.f32.mrf.mxu0
    %v1442 = vadd.f32 %v1319, %v1441
    %v1443 = vpop.f32.mrf.mxu0
    %v1444 = vadd.f32 %v1321, %v1443
    %1445 = vmatprep.mubr.f32.mxu0 0.0
    %v1446 = vand.u32 %v180, 4294901760
    %1447 = vmatmul.mubr.f32.gmra.mxu0 %v1446
    %v1448 = vpop.f32.mrf.mxu0
    %v1449 = vadd.f32 %v1328, %v1448
    %v1450 = vpop.f32.mrf.mxu0
    %v1451 = vadd.f32 %v1330, %v1450
    %1452 = vmatprep.mubr.f32.mxu0 0.0
    %v1453 = vand.u32 %v183, 4294901760
    %1454 = vmatmul.mubr.f32.gmra.mxu0 %v1453
    %v1455 = vpop.f32.mrf.mxu0
    %v1456 = vadd.f32 %v1337, %v1455
    %v1457 = vpop.f32.mrf.mxu0
    %v1458 = vadd.f32 %v1339, %v1457
    %1459 = vmatprep.mubr.f32.mxu0 0.0
    %v1460 = vand.u32 %v186, 4294901760
    %1461 = vmatmul.mubr.f32.gmra.mxu0 %v1460
    %v1462 = vpop.f32.mrf.mxu0
    %v1463 = vadd.f32 %v1346, %v1462
    %v1464 = vpop.f32.mrf.mxu0
    %v1465 = vadd.f32 %v1348, %v1464
    %1466 = vdwg.mxu0
    %1467 = vmatprep.subr.mxu0 0.0
    %1468 = vmatpush1.msra.mxu0 0.0
    %1469 = vmatprep.subr.mxu0 0.0
    %1470 = vmatpush1.msra.mxu0 0.0
    %1471 = vmatprep.subr.mxu0 0.0
    %1472 = vmatpush1.msra.mxu0 0.0
    %1473 = vmatprep.subr.mxu0 0.0
    %1474 = vmatpush1.msra.mxu0 0.0
    %1475 = vmatprep.subr.mxu0 0.0
    %1476 = vmatpush1.msra.mxu0 0.0
    %1477 = vmatprep.subr.mxu0 0.0
    %1478 = vmatpush1.msra.mxu0 0.0
    %1479 = vmatprep.subr.mxu0 0.0
    %1480 = vmatpush1.msra.mxu0 0.0
    %1481 = vmatprep.subr.mxu0 0.0
    %1482 = vmatpush1.msra.mxu0 0.0
    %1483 = vmatprep.subr.mxu0 0.0
    %1484 = vmatpush1.msra.mxu0 0.0
    %1485 = vmatprep.subr.mxu0 0.0
    %1486 = vmatpush1.msra.mxu0 0.0
    %1487 = vmatprep.subr.mxu0 0.0
    %1488 = vmatpush1.msra.mxu0 0.0
    %1489 = vmatprep.subr.mxu0 0.0
    %1490 = vmatpush1.msra.mxu0 0.0
    %v1491 = vand.u32 %v146, 4294901760
    %1492 = vmatprep.subr.mxu0 %v1491
    %v1493 = vand.u32 %v145, 4294901760
    %1494 = vmatpush1.msra.mxu0 %v1493
    %v1495 = vand.u32 %v142, 4294901760
    %1496 = vmatprep.subr.mxu0 %v1495
    %v1497 = vand.u32 %v141, 4294901760
    %1498 = vmatpush1.msra.mxu0 %v1497
    %v1499 = vand.u32 %v138, 4294901760
    %1500 = vmatprep.subr.mxu0 %v1499
    %v1501 = vand.u32 %v137, 4294901760
    %1502 = vmatpush1.msra.mxu0 %v1501
    %v1503 = vand.u32 %v134, 4294901760
    %1504 = vmatprep.subr.mxu0 %v1503
    %v1505 = vand.u32 %v133, 4294901760
    %1506 = vmatpush1.msra.mxu0 %v1505
    %1507 = vmatprep.subr.mxu0 0.0
    %1508 = vmatpush2.msra.mxu0 0.0
    %1509 = vmatprep.subr.mxu0 0.0
    %1510 = vmatpush2.msra.mxu0 0.0
    %1511 = vmatprep.subr.mxu0 0.0
    %1512 = vmatpush2.msra.mxu0 0.0
    %1513 = vmatprep.subr.mxu0 0.0
    %1514 = vmatpush2.msra.mxu0 0.0
    %1515 = vmatprep.subr.mxu0 0.0
    %1516 = vmatpush2.msra.mxu0 0.0
    %1517 = vmatprep.subr.mxu0 0.0
    %1518 = vmatpush2.msra.mxu0 0.0
    %1519 = vmatprep.subr.mxu0 0.0
    %1520 = vmatpush2.msra.mxu0 0.0
    %1521 = vmatprep.subr.mxu0 0.0
    %1522 = vmatpush2.msra.mxu0 0.0
    %1523 = vmatprep.subr.mxu0 0.0
    %1524 = vmatpush2.msra.mxu0 0.0
    %1525 = vmatprep.subr.mxu0 0.0
    %1526 = vmatpush2.msra.mxu0 0.0
    %1527 = vmatprep.subr.mxu0 0.0
    %1528 = vmatpush2.msra.mxu0 0.0
    %1529 = vmatprep.subr.mxu0 0.0
    %1530 = vmatpush2.msra.mxu0 0.0
    %1531 = vmatprep.subr.mxu0 0.0
    %1532 = vmatpush2.msra.mxu0 0.0
    %1533 = vmatprep.subr.mxu0 0.0
    %1534 = vmatpush2.msra.mxu0 0.0
    %1535 = vmatprep.subr.mxu0 0.0
    %1536 = vmatpush2.msra.mxu0 0.0
    %1537 = vmatprep.subr.mxu0 0.0
    %1538 = vmatpush2.msra.mxu0 0.0
    %1539 = vmatprep.mubr.f32.mxu0 0.0
    %v1540 = vand.u32 %v177, 4294901760
    %1541 = vmatmul.mubr.f32.gmra.mxu0 %v1540
    %v1542 = vpop.f32.mrf.mxu0
    %v1543 = vadd.f32 %v1442, %v1542
    %v1544 = vpop.f32.mrf.mxu0
    %v1545 = vadd.f32 %v1444, %v1544
    %1546 = vmatprep.mubr.f32.mxu0 0.0
    %v1547 = vand.u32 %v180, 4294901760
    %1548 = vmatmul.mubr.f32.gmra.mxu0 %v1547
    %v1549 = vpop.f32.mrf.mxu0
    %v1550 = vadd.f32 %v1449, %v1549
    %v1551 = vpop.f32.mrf.mxu0
    %v1552 = vadd.f32 %v1451, %v1551
    %1553 = vmatprep.mubr.f32.mxu0 0.0
    %v1554 = vand.u32 %v183, 4294901760
    %1555 = vmatmul.mubr.f32.gmra.mxu0 %v1554
    %v1556 = vpop.f32.mrf.mxu0
    %v1557 = vadd.f32 %v1456, %v1556
    %v1558 = vpop.f32.mrf.mxu0
    %v1559 = vadd.f32 %v1458, %v1558
    %1560 = vmatprep.mubr.f32.mxu0 0.0
    %v1561 = vand.u32 %v186, 4294901760
    %1562 = vmatmul.mubr.f32.gmra.mxu0 %v1561
    %v1563 = vpop.f32.mrf.mxu0
    %v1564 = vadd.f32 %v1463, %v1563
    %v1565 = vpop.f32.mrf.mxu0
    %v1566 = vadd.f32 %v1465, %v1565
    %1567 = vdwg.mxu0
    %v1568 = vmax.f32 %v853, 0.0
    %v1569 = vmax.f32 %v855, 0.0
    %v1570 = vmax.f32 %v1543, 0.0
    %v1571 = vmax.f32 %v1545, 0.0
    %v1572 = vmax.f32 %v860, 0.0
    %v1573 = vmax.f32 %v862, 0.0
    %v1574 = vmax.f32 %v1550, 0.0
    %v1575 = vmax.f32 %v1552, 0.0
    %v1576 = vmax.f32 %v867, 0.0
    %v1577 = vmax.f32 %v869, 0.0
    %v1578 = vmax.f32 %v1557, 0.0
    %v1579 = vmax.f32 %v1559, 0.0
    %v1580 = vmax.f32 %v874, 0.0
    %v1581 = vmax.f32 %v876, 0.0
    %v1582 = vmax.f32 %v1564, 0.0
    %v1583 = vmax.f32 %v1566, 0.0
    %v1584 = vld [vmem:[#allocation2] sm:$0x1]
    %v1585 = vld [vmem:[%s5] sm:$0xff]
    %v1586 = vld [vmem:[%s5 + $0x8] sm:$0xff]
    %v1587 = vld [vmem:[%s5 + $0x10] sm:$0xff]
    %v1588 = vld [vmem:[%s5 + $0x18] sm:$0xff]
    %1590 = vset.pattern.permute.xlu0 0
    %1591 = vperm.xlu0 %1590, %v1585
    %v1592 = vpop.permute.xlu0 %1591
    %1595 = vset.pattern.permute.xlu0 0
    %1596 = vperm.xlu0 %1595, %v1586
    %v1597 = vpop.permute.xlu0 %1596
    %1600 = vset.pattern.permute.xlu0 0
    %1601 = vperm.xlu0 %1600, %v1587
    %v1602 = vpop.permute.xlu0 %1601
    %1605 = vset.pattern.permute.xlu0 0
    %1606 = vperm.xlu0 %1605, %v1588
    %v1607 = vpop.permute.xlu0 %1606
    %v1609 = vmul.f32 %v1568, %v1592
    %v1610 = vmul.f32 %v1569, %v1592
    %v1611 = vmul.f32 %v1570, %v1592
    %v1612 = vmul.f32 %v1571, %v1592
    %v1613 = vmul.f32 %v1572, %v1597
    %v1614 = vmul.f32 %v1573, %v1597
    %v1615 = vmul.f32 %v1574, %v1597
    %v1616 = vmul.f32 %v1575, %v1597
    %v1617 = vmul.f32 %v1576, %v1602
    %v1618 = vmul.f32 %v1577, %v1602
    %v1619 = vmul.f32 %v1578, %v1602
    %v1620 = vmul.f32 %v1579, %v1602
    %v1621 = vmul.f32 %v1580, %v1607
    %v1622 = vmul.f32 %v1581, %v1607
    %v1623 = vmul.f32 %v1582, %v1607
    %v1624 = vmul.f32 %v1583, %v1607
    %v1625 = vadd.f32 %v1609, %v1613
    %v1626 = vadd.f32 %v1625, %v1617
    %v1627 = vadd.f32 %v1626, %v1621
    %v1628 = vrot.slane %v1627, 4
    %v1629 = vadd.f32 %v1627, %v1628
    %v1630 = vrot.slane %v1629, 2
    %v1631 = vadd.f32 %v1629, %v1630
    %v1632 = vrot.slane %v1631, 1
    %v1633 = vadd.f32 %v1631, %v1632
    %v1634 = vadd.f32 %v1610, %v1614
    %v1635 = vadd.f32 %v1634, %v1618
    %v1636 = vadd.f32 %v1635, %v1622
    %v1637 = vrot.slane %v1636, 4
    %v1638 = vadd.f32 %v1636, %v1637
    %v1639 = vrot.slane %v1638, 2
    %v1640 = vadd.f32 %v1638, %v1639
    %v1641 = vrot.slane %v1640, 1
    %v1642 = vadd.f32 %v1640, %v1641
    %v1643 = vadd.f32 %v1611, %v1615
    %v1644 = vadd.f32 %v1643, %v1619
    %v1645 = vadd.f32 %v1644, %v1623
    %v1646 = vrot.slane %v1645, 4
    %v1647 = vadd.f32 %v1645, %v1646
    %v1648 = vrot.slane %v1647, 2
    %v1649 = vadd.f32 %v1647, %v1648
    %v1650 = vrot.slane %v1649, 1
    %v1651 = vadd.f32 %v1649, %v1650
    %v1652 = vadd.f32 %v1612, %v1616
    %v1653 = vadd.f32 %v1652, %v1620
    %v1654 = vadd.f32 %v1653, %v1624
    %v1655 = vrot.slane %v1654, 4
    %v1656 = vadd.f32 %v1654, %v1655
    %v1657 = vrot.slane %v1656, 2
    %v1658 = vadd.f32 %v1656, %v1657
    %v1659 = vrot.slane %v1658, 1
    %v1660 = vadd.f32 %v1658, %v1659
    %1662 = vset.pattern.permute.xlu0 0
    %1663 = vperm.xlu0 %1662, %v1584
    %v1664 = vpop.permute.xlu0 %1663
    %v1666 = vlaneseq
    %v1667 = vshrl.u32 %v1666, 7
    %v1668 = vsub.s32 0, %v1667
    %v1669 = vrot.slane %v1664, %v1668
    %v1670 = vadd.f32 %v1633, %v1669
    %v1671 = vadd.f32 %v1642, %v1669
    %v1672 = vadd.f32 %v1651, %v1669
    %v1673 = vadd.f32 %v1660, %v1669
    %v1678 = vcombine.low %v1670, %v1671
    %v1679 = vcombine.low %v1672, %v1673
    %v1681 = vunpack.c.l.s4 1966171168
    %v1682 = vunpack.c.0.s8 %v1681
    %v1683 = vlaneseq
    %v1684 = vshrl.u32 %v1683, 7
    %v1685 = vsub.s32 %v1682, %v1684
    %v1686 = vrot.slane %v1678, %v1685
    %v1688 = vunpack.c.l.s4 1966171168
    %v1689 = vunpack.c.0.s8 %v1688
    %v1690 = vlaneseq
    %v1691 = vshrl.u32 %v1690, 7
    %v1692 = vsub.s32 %v1689, %v1691
    %v1693 = vrot.slane %v1679, %v1692
    %v1694 = vcombine.low %v1686, %v1693
    %v1696 = vunpack.c.l.s4 1966171168
    %v1697 = vunpack.c.0.s8 %v1696
    %v1698 = vlaneseq
    %v1699 = vshrl.u32 %v1698, 7
    %v1700 = vsub.s32 %v1697, %v1699
    %v1701 = vrot.slane %v1694, %v1700
    %v1703 = vlaneseq
    %vm1704 = vcmp.ge.s32.totalorder %v1703, 0
    %vm1705 = vcmp.lt.s32.totalorder %v1703, 512
    %vm1706 = vmand %vm1704, %vm1705
    %1707 = vst.msk [vmem:[#allocation3] sm:$0xf] %vm1706, %v1701
    // Predicated region
    $region30: #{sinusoid_mlp_forward.1} parent=1 // pred_check
      _
    $region31: #{sinusoid_mlp_forward.1} parent=1 // pred_check_branch
      %1709 = sbr.rel (0) target = $region33
    $region32: #{sinusoid_mlp_forward.1} parent=1 // pred_region
      %s1711 = ssub.s32 64, 64
      %1712 = vsyncadd [#allocation4], %s1711
      %s1714 = sshll.u32 [#allocation3], 4
      %s1715 = int_to_ptr.vmem [resolvable:$true] %s1714
      %1717 = dma.vmem_to_hbm [thread:$0]  %s1715, 64, %s7, [#allocation4]
    $region33: #{sinusoid_mlp_forward.1} parent=1 // pred_fallthru
      _
    // Predicated region
    $region34: #{sinusoid_mlp_forward.1} parent=1 // pred_check
      _
    $region35: #{sinusoid_mlp_forward.1} parent=1 // pred_check_branch
      %1719 = sbr.rel (0) target = $region37
    $region36: #{sinusoid_mlp_forward.1} parent=1 // pred_region
      %1720 = dma.done [#allocation4], 64
    $region37: #{sinusoid_mlp_forward.1} parent=1 // pred_fallthru
      _
    %1721 = vsyncpa [#allocation4], 1

</llo_original>
